<compile_context>
chip_gen: v6e
topology: v6e:2x2x1
jax: 0.10.0
libtpu: 0.0.40
codegen_flags: <defaults>
</compile_context>

<pallas_src>
import functools

import jax
import jax.numpy as jnp
from jax.experimental import pallas as pl
from jax.experimental.pallas import tpu as pltpu

DIM = 2
N = 128  # hidden base width (fc1: DIM->N, fc2: N->2N, fc3: 2N->2N, fc4: 2N->DIM)


def _sigmoid(x):
    # logistic(x) == 0.5*(tanh(0.5*x)+1): one EUP tanh push, no exp + divide.
    return 0.5 * jnp.tanh(0.5 * x) + 0.5


def _mlp_kernel(x_ref,
                w1_ref, b1_ref,
                w2_ref, b2_ref,
                w3_ref, b3_ref,
                w4_ref, b4_ref,
                o_ref):
    x = x_ref[...]  # (TB, DIM) f32

    # fc1: K = DIM (= 2) contraction is degenerate on the MXU; do it on the
    # VPU as DIM broadcast mul+adds (VALU slots have slack here).
    acc1 = x[:, 0:1] * w1_ref[0:1, :]
    for d in range(1, x.shape[1]):
        acc1 = acc1 + x[:, d:d + 1] * w1_ref[d:d + 1, :]
    h1 = _sigmoid(acc1 + b1_ref[...])

    # fc2/fc3/fc4: MXU contractions. Activations are cast to the weight dtype
    # (bf16 when enabled) with f32 accumulation; bias add + sigmoid stay f32.
    h1 = h1.astype(w2_ref.dtype)
    h2 = _sigmoid(
        jnp.dot(h1, w2_ref[...], preferred_element_type=jnp.float32) + b2_ref[...])
    h2 = h2.astype(w3_ref.dtype)
    h3 = _sigmoid(
        jnp.dot(h2, w3_ref[...], preferred_element_type=jnp.float32) + b3_ref[...])
    h3 = h3.astype(w4_ref.dtype)
    out = jnp.dot(h3, w4_ref[...], preferred_element_type=jnp.float32) + b4_ref[...]

    o_ref[...] = out.astype(o_ref.dtype)


def _round_up(x, m):
    return (x + m - 1) // m * m


@functools.partial(jax.jit, static_argnames=("block_b", "use_bf16"))
def v_mlp_forward(x, params, *, block_b=1024, use_bf16=True):
    """x: (B, dim) float32. params: dict of transposed weights + biases."""
    B, dim = x.shape

    w1, b1 = params["w1"], params["b1"]   # (dim, N),   (1, N)
    w2, b2 = params["w2"], params["b2"]   # (N, 2N),    (1, 2N)
    w3, b3 = params["w3"], params["b3"]   # (2N, 2N),   (1, 2N)
    w4, b4 = params["w4"], params["b4"]   # (2N, dim),  (1, dim)

    # bf16 matmul inputs (f32 accumulation) for v6e/v7x MXU rate.
    mm_dtype = jnp.bfloat16 if use_bf16 else x.dtype
    w2c, w3c, w4c = (w.astype(mm_dtype) for w in (w2, w3, w4))

    # Batch tiling: large tiles amortize per-grid-step overhead, but keep at
    # least 2 grid steps when the batch allows it (v7x megacore). Tail rows
    # (B not a multiple of the tile) are handled by padding + slicing.
    b_min = _round_up(B, 8)
    eff_block = min(block_b, b_min)
    if b_min > 8 and b_min // eff_block < 2:
        eff_block = _round_up(pl.cdiv(b_min, 2), 8)
    B_pad = _round_up(B, eff_block)
    if B_pad != B:
        x = jnp.pad(x, ((0, B_pad - B), (0, 0)))

    grid = (B_pad // eff_block,)

    # Weights/biases are replicated across grid steps (same (0, 0) block).
    def rep(shape):
        return pl.BlockSpec(shape, lambda i: (0, 0))

    out = pl.pallas_call(
        _mlp_kernel,
        out_shape=jax.ShapeDtypeStruct((B_pad, dim), x.dtype),
        grid_spec=pltpu.PrefetchScalarGridSpec(
            num_scalar_prefetch=0,
            grid=grid,
            in_specs=[
                pl.BlockSpec((eff_block, dim), lambda i: (i, 0)),   # x tile
                rep(w1.shape), rep(b1.shape),
                rep(w2c.shape), rep(b2.shape),
                rep(w3c.shape), rep(b3.shape),
                rep(w4c.shape), rep(b4.shape),
            ],
            out_specs=pl.BlockSpec((eff_block, dim), lambda i: (i, 0)),
        ),
        compiler_params=pltpu.CompilerParams(
            dimension_semantics=("parallel",)),
    )(x, w1, b1, w2c, b2, w3c, b3, w4c, b4)

    return out[:B]


def init_params(key, dim=DIM, n=N):
    """Deterministic PyTorch-style (kaiming-uniform-ish) init.

    Weights stored transposed: (in_features, out_features)."""
    def linear(key, fan_in, fan_out):
        kw, kb = jax.random.split(key)
        bound = 1.0 / jnp.sqrt(fan_in)
        w = jax.random.uniform(kw, (fan_in, fan_out), jnp.float32, -bound, bound)
        b = jax.random.uniform(kb, (1, fan_out), jnp.float32, -bound, bound)
        return w, b

    k1, k2, k3, k4 = jax.random.split(key, 4)
    w1, b1 = linear(k1, dim, n)
    w2, b2 = linear(k2, n, 2 * n)
    w3, b3 = linear(k3, 2 * n, 2 * n)
    w4, b4 = linear(k4, 2 * n, dim)
    return dict(w1=w1, b1=b1, w2=w2, b2=b2, w3=w3, b3=b3, w4=w4, b4=b4)


def v_mlp_ref(x, p):
    """Pure-JAX f32 reference of the PyTorch forward."""
    h = jax.nn.sigmoid(x @ p["w1"] + p["b1"])
    h = jax.nn.sigmoid(h @ p["w2"] + p["b2"])
    h = jax.nn.sigmoid(h @ p["w3"] + p["b3"])
    return h @ p["w4"] + p["b4"]


if __name__ == "__main__":
    key = jax.random.PRNGKey(0)
    kx, kp = jax.random.split(key)

    batch = 300   # deliberately NOT a multiple of the tile: exercises tail padding
    x = jax.random.normal(kx, (batch, DIM), jnp.float32)
    params = init_params(kp)

    ref = v_mlp_ref(x, params)

    # Exact-dtype path: f32 matmuls, tight tolerance.
    out_f32 = jax.block_until_ready(v_mlp_forward(x, params, use_bf16=False))
    assert out_f32.shape == (batch, DIM)
    assert jnp.allclose(out_f32, ref, atol=1e-4, rtol=1e-4), "f32 kernel mismatch"

    # Default fast path: bf16 matmul inputs, f32 accumulation (looser tolerance).
    out_bf16 = jax.block_until_ready(v_mlp_forward(x, params))
    assert out_bf16.shape == (batch, DIM)
    assert jnp.allclose(out_bf16, ref, atol=3e-2, rtol=3e-2), "bf16 kernel mismatch"

    print("KERNEL_OK")
</pallas_src>

<mosaic_0001>
module attributes {stable_mosaic.version = 11 : i64} {
  func.func @_mlp_kernel(%arg0: i32, %arg1: memref<152x2xf32, #tpu.memory_space<vmem>>, %arg2: memref<2x128xf32, #tpu.memory_space<vmem>>, %arg3: memref<1x128xf32, #tpu.memory_space<vmem>>, %arg4: memref<128x256xf32, #tpu.memory_space<vmem>>, %arg5: memref<1x256xf32, #tpu.memory_space<vmem>>, %arg6: memref<256x256xf32, #tpu.memory_space<vmem>>, %arg7: memref<1x256xf32, #tpu.memory_space<vmem>>, %arg8: memref<256x2xf32, #tpu.memory_space<vmem>>, %arg9: memref<1x2xf32, #tpu.memory_space<vmem>>, %arg10: memref<152x2xf32, #tpu.memory_space<vmem>>) attributes {dimension_semantics = [#tpu.dimension_semantics<parallel>], iteration_bounds = array<i64: 2>, scalar_prefetch = 0 : i64, scratch_operands = 0 : i64, tpu.core_type = #tpu.core_type<tc>, window_params = [{transform_indices = @transform_0, window_bounds = array<i64: 152, 2>}, {pipeline_mode = #tpu.pipeline_mode<synchronous>, transform_indices = @transform_1, window_bounds = array<i64: 2, 128>}, {pipeline_mode = #tpu.pipeline_mode<synchronous>, transform_indices = @transform_2, window_bounds = array<i64: 1, 128>}, {pipeline_mode = #tpu.pipeline_mode<synchronous>, transform_indices = @transform_3, window_bounds = array<i64: 128, 256>}, {pipeline_mode = #tpu.pipeline_mode<synchronous>, transform_indices = @transform_4, window_bounds = array<i64: 1, 256>}, {pipeline_mode = #tpu.pipeline_mode<synchronous>, transform_indices = @transform_5, window_bounds = array<i64: 256, 256>}, {pipeline_mode = #tpu.pipeline_mode<synchronous>, transform_indices = @transform_6, window_bounds = array<i64: 1, 256>}, {pipeline_mode = #tpu.pipeline_mode<synchronous>, transform_indices = @transform_7, window_bounds = array<i64: 256, 2>}, {pipeline_mode = #tpu.pipeline_mode<synchronous>, transform_indices = @transform_8, window_bounds = array<i64: 1, 2>}, {transform_indices = @transform_9, window_bounds = array<i64: 152, 2>}]} {
    %c0 = arith.constant 0 : index
    %c0_0 = arith.constant 0 : index
    %0 = vector.load %arg1[%c0, %c0_0] : memref<152x2xf32, #tpu.memory_space<vmem>>, vector<152x2xf32>
    %1 = vector.extract_strided_slice %0 {offsets = [0, 0], sizes = [152, 1], strides = [1, 1]} : vector<152x2xf32> to vector<152x1xf32>
    %c0_1 = arith.constant 0 : index
    %c0_2 = arith.constant 0 : index
    %2 = vector.load %arg2[%c0_1, %c0_2] : memref<2x128xf32, #tpu.memory_space<vmem>>, vector<1x128xf32>
    %3 = vector.broadcast %1 : vector<152x1xf32> to vector<152x128xf32>
    %4 = vector.broadcast %2 : vector<1x128xf32> to vector<152x128xf32>
    %5 = arith.mulf %3, %4 : vector<152x128xf32>
    %6 = vector.extract_strided_slice %0 {offsets = [0, 1], sizes = [152, 1], strides = [1, 1]} : vector<152x2xf32> to vector<152x1xf32>
    %c1 = arith.constant 1 : index
    %c0_3 = arith.constant 0 : index
    %7 = vector.load %arg2[%c1, %c0_3] : memref<2x128xf32, #tpu.memory_space<vmem>>, vector<1x128xf32>
    %8 = vector.broadcast %6 : vector<152x1xf32> to vector<152x128xf32>
    %9 = vector.broadcast %7 : vector<1x128xf32> to vector<152x128xf32>
    %10 = arith.mulf %8, %9 : vector<152x128xf32>
    %11 = arith.addf %5, %10 : vector<152x128xf32>
    %c0_4 = arith.constant 0 : index
    %c0_5 = arith.constant 0 : index
    %12 = vector.load %arg3[%c0_4, %c0_5] : memref<1x128xf32, #tpu.memory_space<vmem>>, vector<1x128xf32>
    %13 = vector.broadcast %12 : vector<1x128xf32> to vector<152x128xf32>
    %14 = arith.addf %11, %13 : vector<152x128xf32>
    %cst = arith.constant 5.000000e-01 : f32
    %15 = vector.broadcast %cst : f32 to vector<152x128xf32>
    %16 = arith.mulf %15, %14 : vector<152x128xf32>
    %17 = math.tanh %16 : vector<152x128xf32>
    %cst_6 = arith.constant 5.000000e-01 : f32
    %18 = vector.broadcast %cst_6 : f32 to vector<152x128xf32>
    %19 = arith.mulf %18, %17 : vector<152x128xf32>
    %cst_7 = arith.constant 5.000000e-01 : f32
    %20 = vector.broadcast %cst_7 : f32 to vector<152x128xf32>
    %21 = arith.addf %19, %20 : vector<152x128xf32>
    %c0_8 = arith.constant 0 : index
    %c0_9 = arith.constant 0 : index
    %22 = vector.load %arg4[%c0_8, %c0_9] : memref<128x256xf32, #tpu.memory_space<vmem>>, vector<128x256xf32>
    %cst_10 = arith.constant dense<0.000000e+00> : vector<152x256xf32>
    %23 = tpu.matmul %21, %22, %cst_10 {dimension_numbers = #tpu.dot_dimension_numbers<[1], [0], [0], [1], [0, 0, 1, 1], [], []>} : vector<152x128xf32>, vector<128x256xf32>, vector<152x256xf32> -> vector<152x256xf32>
    %c0_11 = arith.constant 0 : index
    %c0_12 = arith.constant 0 : index
    %24 = vector.load %arg5[%c0_11, %c0_12] : memref<1x256xf32, #tpu.memory_space<vmem>>, vector<1x256xf32>
    %25 = vector.broadcast %24 : vector<1x256xf32> to vector<152x256xf32>
    %26 = arith.addf %23, %25 : vector<152x256xf32>
    %cst_13 = arith.constant 5.000000e-01 : f32
    %27 = vector.broadcast %cst_13 : f32 to vector<152x256xf32>
    %28 = arith.mulf %27, %26 : vector<152x256xf32>
    %29 = math.tanh %28 : vector<152x256xf32>
    %cst_14 = arith.constant 5.000000e-01 : f32
    %30 = vector.broadcast %cst_14 : f32 to vector<152x256xf32>
    %31 = arith.mulf %30, %29 : vector<152x256xf32>
    %cst_15 = arith.constant 5.000000e-01 : f32
    %32 = vector.broadcast %cst_15 : f32 to vector<152x256xf32>
    %33 = arith.addf %31, %32 : vector<152x256xf32>
    %c0_16 = arith.constant 0 : index
    %c0_17 = arith.constant 0 : index
    %34 = vector.load %arg6[%c0_16, %c0_17] : memref<256x256xf32, #tpu.memory_space<vmem>>, vector<256x256xf32>
    %cst_18 = arith.constant dense<0.000000e+00> : vector<152x256xf32>
    %35 = tpu.matmul %33, %34, %cst_18 {dimension_numbers = #tpu.dot_dimension_numbers<[1], [0], [0], [1], [0, 0, 1, 1], [], []>} : vector<152x256xf32>, vector<256x256xf32>, vector<152x256xf32> -> vector<152x256xf32>
    %c0_19 = arith.constant 0 : index
    %c0_20 = arith.constant 0 : index
    %36 = vector.load %arg7[%c0_19, %c0_20] : memref<1x256xf32, #tpu.memory_space<vmem>>, vector<1x256xf32>
    %37 = vector.broadcast %36 : vector<1x256xf32> to vector<152x256xf32>
    %38 = arith.addf %35, %37 : vector<152x256xf32>
    %cst_21 = arith.constant 5.000000e-01 : f32
    %39 = vector.broadcast %cst_21 : f32 to vector<152x256xf32>
    %40 = arith.mulf %39, %38 : vector<152x256xf32>
    %41 = math.tanh %40 : vector<152x256xf32>
    %cst_22 = arith.constant 5.000000e-01 : f32
    %42 = vector.broadcast %cst_22 : f32 to vector<152x256xf32>
    %43 = arith.mulf %42, %41 : vector<152x256xf32>
    %cst_23 = arith.constant 5.000000e-01 : f32
    %44 = vector.broadcast %cst_23 : f32 to vector<152x256xf32>
    %45 = arith.addf %43, %44 : vector<152x256xf32>
    %c0_24 = arith.constant 0 : index
    %c0_25 = arith.constant 0 : index
    %46 = vector.load %arg8[%c0_24, %c0_25] : memref<256x2xf32, #tpu.memory_space<vmem>>, vector<256x2xf32>
    %cst_26 = arith.constant dense<0.000000e+00> : vector<152x2xf32>
    %47 = tpu.matmul %45, %46, %cst_26 {dimension_numbers = #tpu.dot_dimension_numbers<[1], [0], [0], [1], [0, 0, 1, 1], [], []>} : vector<152x256xf32>, vector<256x2xf32>, vector<152x2xf32> -> vector<152x2xf32>
    %c0_27 = arith.constant 0 : index
    %c0_28 = arith.constant 0 : index
    %48 = vector.load %arg9[%c0_27, %c0_28] : memref<1x2xf32, #tpu.memory_space<vmem>>, vector<1x2xf32>
    %49 = vector.broadcast %48 : vector<1x2xf32> to vector<152x2xf32>
    %50 = arith.addf %47, %49 : vector<152x2xf32>
    %c0_29 = arith.constant 0 : index
    %c0_30 = arith.constant 0 : index
    %51 = vector.load %arg10[%c0_29, %c0_30] : memref<152x2xf32, #tpu.memory_space<vmem>>, vector<152x2xf32>
    tpu.vector_store %arg10[%c0_29, %c0_30], %50 {strides = array<i32>} : memref<152x2xf32, #tpu.memory_space<vmem>>, vector<152x2xf32>,
    return
  }
  func.func @transform_0(%arg0: i32) -> (i32, i32) {
    %c0_i32 = arith.constant 0 : i32
    %c0_i32_0 = arith.constant 0 : i32
    return %arg0, %c0_i32 : i32, i32
  }
  func.func @transform_1(%arg0: i32) -> (i32, i32) {
    %c0_i32 = arith.constant 0 : i32
    %c0_i32_0 = arith.constant 0 : i32
    %c0_i32_1 = arith.constant 0 : i32
    return %c0_i32, %c0_i32_0 : i32, i32
  }
  func.func @transform_2(%arg0: i32) -> (i32, i32) {
    %c0_i32 = arith.constant 0 : i32
    %c0_i32_0 = arith.constant 0 : i32
    %c0_i32_1 = arith.constant 0 : i32
    return %c0_i32, %c0_i32_0 : i32, i32
  }
  func.func @transform_3(%arg0: i32) -> (i32, i32) {
    %c0_i32 = arith.constant 0 : i32
    %c0_i32_0 = arith.constant 0 : i32
    %c0_i32_1 = arith.constant 0 : i32
    return %c0_i32, %c0_i32_0 : i32, i32
  }
  func.func @transform_4(%arg0: i32) -> (i32, i32) {
    %c0_i32 = arith.constant 0 : i32
    %c0_i32_0 = arith.constant 0 : i32
    %c0_i32_1 = arith.constant 0 : i32
    return %c0_i32, %c0_i32_0 : i32, i32
  }
  func.func @transform_5(%arg0: i32) -> (i32, i32) {
    %c0_i32 = arith.constant 0 : i32
    %c0_i32_0 = arith.constant 0 : i32
    %c0_i32_1 = arith.constant 0 : i32
    return %c0_i32, %c0_i32_0 : i32, i32
  }
  func.func @transform_6(%arg0: i32) -> (i32, i32) {
    %c0_i32 = arith.constant 0 : i32
    %c0_i32_0 = arith.constant 0 : i32
    %c0_i32_1 = arith.constant 0 : i32
    return %c0_i32, %c0_i32_0 : i32, i32
  }
  func.func @transform_7(%arg0: i32) -> (i32, i32) {
    %c0_i32 = arith.constant 0 : i32
    %c0_i32_0 = arith.constant 0 : i32
    %c0_i32_1 = arith.constant 0 : i32
    return %c0_i32, %c0_i32_0 : i32, i32
  }
  func.func @transform_8(%arg0: i32) -> (i32, i32) {
    %c0_i32 = arith.constant 0 : i32
    %c0_i32_0 = arith.constant 0 : i32
    %c0_i32_1 = arith.constant 0 : i32
    return %c0_i32, %c0_i32_0 : i32, i32
  }
  func.func @transform_9(%arg0: i32) -> (i32, i32) {
    %c0_i32 = arith.constant 0 : i32
    %c0_i32_0 = arith.constant 0 : i32
    return %arg0, %c0_i32 : i32, i32
  }
}

</mosaic_0001>

<llo_original>
// kernel: v_mlp_forward.1
$region0: #{v_mlp_forward.1}
  #allocation0 [shape = 'u32[]', space=smem, size = 0x4, offset = 0x4, fixed_abs, tag = 'smem constant byte address 0x4 - core index']
  #allocation1 [shape = 'u32[144,128]{1,0:T(1,128)}', space=vmem, size = 0x12000, scoped, tag = 'internal scratch']
  %s0 = inlined_call_operand.vmem [shape: f32[304,2], index: 0, kind: input, shape index: {}]
  %s1 = inlined_call_operand.vmem [shape: f32[2,128], index: 1, kind: input, shape index: {}]
  %s2 = inlined_call_operand.vmem [shape: f32[1,128], index: 2, kind: input, shape index: {}]
  %s3 = inlined_call_operand.vmem [shape: f32[128,256], index: 3, kind: input, shape index: {}]
  %s4 = inlined_call_operand.vmem [shape: f32[1,256], index: 4, kind: input, shape index: {}]
  %s5 = inlined_call_operand.vmem [shape: f32[256,256], index: 5, kind: input, shape index: {}]
  %s6 = inlined_call_operand.vmem [shape: f32[1,256], index: 6, kind: input, shape index: {}]
  %s7 = inlined_call_operand.vmem [shape: f32[256,2], index: 7, kind: input, shape index: {}]
  %s8 = inlined_call_operand.vmem [shape: f32[1,2], index: 8, kind: input, shape index: {}]
  %s9 = inlined_call_operand.vmem [shape: f32[304,2], index: 9, kind: output, shape index: {}]
  %s10 = sld [smem:[#allocation0]]
  $region69: #{v_mlp_forward.1} parent=0
    _
  %s12 = ssub.s32 1, %s10
  %s13 = scalar_select 0, %s12, %s10
  loop: start=0, step=1, limit=4
  $region2: #{v_mlp_forward.1} parent=0 // loop_pre_header
    _
  $region3: #{v_mlp_forward.1} parent=0 // loop_header
    %s15 = sphi 0, %s19
    %p16 = scmp.ge.s32.totalorder %s15, 4
    %s25 = sphi 0, %s27
    %s28 = sphi 0, %s25
    %s29 = sphi 0, %s28
    %s45 = sphi 0, %s29
    %s49 = sphi 0, %s49
    %s51 = sphi 0, %s49
    %s52 = sphi 0, %s51
    %s66 = sphi 0, %s52
    %s70 = sphi 0, %s70
    %s72 = sphi 0, %s70
    %s73 = sphi 0, %s72
    %s87 = sphi 0, %s73
    %s91 = sphi 0, %s91
    %s93 = sphi 0, %s91
    %s94 = sphi 0, %s93
    %s108 = sphi 0, %s94
    %s112 = sphi 0, %s112
    %s114 = sphi 0, %s112
    %s115 = sphi 0, %s114
    %s129 = sphi 0, %s115
    %s133 = sphi 0, %s133
    %s135 = sphi 0, %s133
    %s136 = sphi 0, %s135
    %s150 = sphi 0, %s136
    %s154 = sphi 0, %s154
    %s156 = sphi 0, %s154
    %s157 = sphi 0, %s156
    %s171 = sphi 0, %s157
    %s175 = sphi 0, %s175
    %s177 = sphi 0, %s175
    %s178 = sphi 0, %s177
    %s192 = sphi 0, %s178
    %s196 = sphi 0, %s196
    %s198 = sphi 0, %s196
    %s199 = sphi 0, %s198
    %s213 = sphi 0, %s199
    %s219 = sphi 0, %s221
    %s222 = sphi 0, %s219
    %s223 = sphi 0, %s222
    %s239 = sphi 0, %s223
  $region4: #{v_mlp_forward.1} parent=0 // loop_header_branch
    %18 = sbr.rel (%p16) target = $region8
  $region5: #{v_mlp_forward.1} parent=0 // loop_body
    %s20 = ssub.s32 %s15, 1
    %s21 = ssub.s32 %s15, 2
    %s22 = sadd.s32 %s15, 1
    %s23 = ssub.s32 %s15, %s22
    %p24 = scmp.eq.s32.totalorder %s23, 0
    %s26 = sadd.s32 %s25, 1
    %s27 = scalar_select %p24, %s25, %s26
    %p30 = pneg %p24
    %p31 = scmp.eq.s32.totalorder %s15, 1
    %p32 = por %p30, %p31
    %p33 = scmp.ne.s32.totalorder %s25, %s28
    %p34 = scmp.eq.s32.totalorder %s15, 0
    %p35 = por %p33, %p34
    %p36 = scmp.ne.s32.totalorder %s25, %s28
    %p37 = scmp.eq.s32.totalorder %s20, 1
    %p38 = por %p36, %p37
    %p39 = scmp.ne.s32.totalorder %s28, %s29
    %p40 = scmp.eq.s32.totalorder %s20, 0
    %p41 = por %p39, %p40
    %p42 = scmp.ne.s32.totalorder %s28, %s29
    %p43 = scmp.eq.s32.totalorder %s21, 1
    %p44 = por %p42, %p43
    %p46 = scmp.ne.s32.totalorder %s29, %s45
    %p47 = scmp.eq.s32.totalorder %s21, 0
    %p48 = por %p46, %p47
    %s50 = sadd.s32 %s49, 1
    %p53 = scmp.eq.s32.totalorder %s15, 1
    %p54 = scmp.ne.s32.totalorder %s49, %s51
    %p55 = scmp.eq.s32.totalorder %s15, 0
    %p56 = por %p54, %p55
    %p57 = scmp.ne.s32.totalorder %s49, %s51
    %p58 = scmp.eq.s32.totalorder %s20, 1
    %p59 = por %p57, %p58
    %p60 = scmp.ne.s32.totalorder %s51, %s52
    %p61 = scmp.eq.s32.totalorder %s20, 0
    %p62 = por %p60, %p61
    %p63 = scmp.ne.s32.totalorder %s51, %s52
    %p64 = scmp.eq.s32.totalorder %s21, 1
    %p65 = por %p63, %p64
    %p67 = scmp.ne.s32.totalorder %s52, %s66
    %p68 = scmp.eq.s32.totalorder %s21, 0
    %p69 = por %p67, %p68
    %s71 = sadd.s32 %s70, 1
    %p74 = scmp.eq.s32.totalorder %s15, 1
    %p75 = scmp.ne.s32.totalorder %s70, %s72
    %p76 = scmp.eq.s32.totalorder %s15, 0
    %p77 = por %p75, %p76
    %p78 = scmp.ne.s32.totalorder %s70, %s72
    %p79 = scmp.eq.s32.totalorder %s20, 1
    %p80 = por %p78, %p79
    %p81 = scmp.ne.s32.totalorder %s72, %s73
    %p82 = scmp.eq.s32.totalorder %s20, 0
    %p83 = por %p81, %p82
    %p84 = scmp.ne.s32.totalorder %s72, %s73
    %p85 = scmp.eq.s32.totalorder %s21, 1
    %p86 = por %p84, %p85
    %p88 = scmp.ne.s32.totalorder %s73, %s87
    %p89 = scmp.eq.s32.totalorder %s21, 0
    %p90 = por %p88, %p89
    %s92 = sadd.s32 %s91, 1
    %p95 = scmp.eq.s32.totalorder %s15, 1
    %p96 = scmp.ne.s32.totalorder %s91, %s93
    %p97 = scmp.eq.s32.totalorder %s15, 0
    %p98 = por %p96, %p97
    %p99 = scmp.ne.s32.totalorder %s91, %s93
    %p100 = scmp.eq.s32.totalorder %s20, 1
    %p101 = por %p99, %p100
    %p102 = scmp.ne.s32.totalorder %s93, %s94
    %p103 = scmp.eq.s32.totalorder %s20, 0
    %p104 = por %p102, %p103
    %p105 = scmp.ne.s32.totalorder %s93, %s94
    %p106 = scmp.eq.s32.totalorder %s21, 1
    %p107 = por %p105, %p106
    %p109 = scmp.ne.s32.totalorder %s94, %s108
    %p110 = scmp.eq.s32.totalorder %s21, 0
    %p111 = por %p109, %p110
    %s113 = sadd.s32 %s112, 1
    %p116 = scmp.eq.s32.totalorder %s15, 1
    %p117 = scmp.ne.s32.totalorder %s112, %s114
    %p118 = scmp.eq.s32.totalorder %s15, 0
    %p119 = por %p117, %p118
    %p120 = scmp.ne.s32.totalorder %s112, %s114
    %p121 = scmp.eq.s32.totalorder %s20, 1
    %p122 = por %p120, %p121
    %p123 = scmp.ne.s32.totalorder %s114, %s115
    %p124 = scmp.eq.s32.totalorder %s20, 0
    %p125 = por %p123, %p124
    %p126 = scmp.ne.s32.totalorder %s114, %s115
    %p127 = scmp.eq.s32.totalorder %s21, 1
    %p128 = por %p126, %p127
    %p130 = scmp.ne.s32.totalorder %s115, %s129
    %p131 = scmp.eq.s32.totalorder %s21, 0
    %p132 = por %p130, %p131
    %s134 = sadd.s32 %s133, 1
    %p137 = scmp.eq.s32.totalorder %s15, 1
    %p138 = scmp.ne.s32.totalorder %s133, %s135
    %p139 = scmp.eq.s32.totalorder %s15, 0
    %p140 = por %p138, %p139
    %p141 = scmp.ne.s32.totalorder %s133, %s135
    %p142 = scmp.eq.s32.totalorder %s20, 1
    %p143 = por %p141, %p142
    %p144 = scmp.ne.s32.totalorder %s135, %s136
    %p145 = scmp.eq.s32.totalorder %s20, 0
    %p146 = por %p144, %p145
    %p147 = scmp.ne.s32.totalorder %s135, %s136
    %p148 = scmp.eq.s32.totalorder %s21, 1
    %p149 = por %p147, %p148
    %p151 = scmp.ne.s32.totalorder %s136, %s150
    %p152 = scmp.eq.s32.totalorder %s21, 0
    %p153 = por %p151, %p152
    %s155 = sadd.s32 %s154, 1
    %p158 = scmp.eq.s32.totalorder %s15, 1
    %p159 = scmp.ne.s32.totalorder %s154, %s156
    %p160 = scmp.eq.s32.totalorder %s15, 0
    %p161 = por %p159, %p160
    %p162 = scmp.ne.s32.totalorder %s154, %s156
    %p163 = scmp.eq.s32.totalorder %s20, 1
    %p164 = por %p162, %p163
    %p165 = scmp.ne.s32.totalorder %s156, %s157
    %p166 = scmp.eq.s32.totalorder %s20, 0
    %p167 = por %p165, %p166
    %p168 = scmp.ne.s32.totalorder %s156, %s157
    %p169 = scmp.eq.s32.totalorder %s21, 1
    %p170 = por %p168, %p169
    %p172 = scmp.ne.s32.totalorder %s157, %s171
    %p173 = scmp.eq.s32.totalorder %s21, 0
    %p174 = por %p172, %p173
    %s176 = sadd.s32 %s175, 1
    %p179 = scmp.eq.s32.totalorder %s15, 1
    %p180 = scmp.ne.s32.totalorder %s175, %s177
    %p181 = scmp.eq.s32.totalorder %s15, 0
    %p182 = por %p180, %p181
    %p183 = scmp.ne.s32.totalorder %s175, %s177
    %p184 = scmp.eq.s32.totalorder %s20, 1
    %p185 = por %p183, %p184
    %p186 = scmp.ne.s32.totalorder %s177, %s178
    %p187 = scmp.eq.s32.totalorder %s20, 0
    %p188 = por %p186, %p187
    %p189 = scmp.ne.s32.totalorder %s177, %s178
    %p190 = scmp.eq.s32.totalorder %s21, 1
    %p191 = por %p189, %p190
    %p193 = scmp.ne.s32.totalorder %s178, %s192
    %p194 = scmp.eq.s32.totalorder %s21, 0
    %p195 = por %p193, %p194
    %s197 = sadd.s32 %s196, 1
    %p200 = scmp.eq.s32.totalorder %s15, 1
    %p201 = scmp.ne.s32.totalorder %s196, %s198
    %p202 = scmp.eq.s32.totalorder %s15, 0
    %p203 = por %p201, %p202
    %p204 = scmp.ne.s32.totalorder %s196, %s198
    %p205 = scmp.eq.s32.totalorder %s20, 1
    %p206 = por %p204, %p205
    %p207 = scmp.ne.s32.totalorder %s198, %s199
    %p208 = scmp.eq.s32.totalorder %s20, 0
    %p209 = por %p207, %p208
    %p210 = scmp.ne.s32.totalorder %s198, %s199
    %p211 = scmp.eq.s32.totalorder %s21, 1
    %p212 = por %p210, %p211
    %p214 = scmp.ne.s32.totalorder %s199, %s213
    %p215 = scmp.eq.s32.totalorder %s21, 0
    %p216 = por %p214, %p215
    %s217 = ssub.s32 %s15, %s22
    %p218 = scmp.eq.s32.totalorder %s217, 0
    %s220 = sadd.s32 %s219, 1
    %s221 = scalar_select %p218, %s219, %s220
    %p224 = pneg %p218
    %p225 = scmp.eq.s32.totalorder %s15, 1
    %p226 = por %p224, %p225
    %p227 = scmp.ne.s32.totalorder %s219, %s222
    %p228 = scmp.eq.s32.totalorder %s15, 0
    %p229 = por %p227, %p228
    %p230 = scmp.ne.s32.totalorder %s219, %s222
    %p231 = scmp.eq.s32.totalorder %s20, 1
    %p232 = por %p230, %p231
    %p233 = scmp.ne.s32.totalorder %s222, %s223
    %p234 = scmp.eq.s32.totalorder %s20, 0
    %p235 = por %p233, %p234
    %p236 = scmp.ne.s32.totalorder %s222, %s223
    %p237 = scmp.eq.s32.totalorder %s21, 1
    %p238 = por %p236, %p237
    %p240 = scmp.ne.s32.totalorder %s223, %s239
    %p241 = scmp.eq.s32.totalorder %s21, 0
    %p242 = por %p240, %p241
    %p243 = scmp.le.s32.totalorder 1, %s15
    %p244 = scmp.lt.s32.totalorder %s15, 3
    %p245 = pnand %p243, %p244
    %p246 = pneg %p245
    // Predicated region
    $region9: #{v_mlp_forward.1} parent=5 // pred_check
      _
    $region10: #{v_mlp_forward.1} parent=5 // pred_check_branch
      %248 = sbr.rel (%p245) target = $region12
    $region11: #{v_mlp_forward.1} parent=5 // pred_region
      %s249 = ssub.s32 %s15, 1
      // Predicated region
      $region13: #{v_mlp_forward.1} parent=11 // pred_check
        %p250 = pneg %p62
      $region14: #{v_mlp_forward.1} parent=11 // pred_check_branch
        %252 = sbr.rel (%p250) target = $region16
      $region15: #{v_mlp_forward.1} parent=11 // pred_region
        _
      $region16: #{v_mlp_forward.1} parent=11 // pred_fallthru
        _
      // Predicated region
      $region17: #{v_mlp_forward.1} parent=11 // pred_check
        %p253 = pneg %p83
      $region18: #{v_mlp_forward.1} parent=11 // pred_check_branch
        %255 = sbr.rel (%p253) target = $region20
      $region19: #{v_mlp_forward.1} parent=11 // pred_region
        _
      $region20: #{v_mlp_forward.1} parent=11 // pred_fallthru
        _
      // Predicated region
      $region21: #{v_mlp_forward.1} parent=11 // pred_check
        %p256 = pneg %p104
      $region22: #{v_mlp_forward.1} parent=11 // pred_check_branch
        %258 = sbr.rel (%p256) target = $region24
      $region23: #{v_mlp_forward.1} parent=11 // pred_region
        _
      $region24: #{v_mlp_forward.1} parent=11 // pred_fallthru
        _
      // Predicated region
      $region25: #{v_mlp_forward.1} parent=11 // pred_check
        %p259 = pneg %p125
      $region26: #{v_mlp_forward.1} parent=11 // pred_check_branch
        %261 = sbr.rel (%p259) target = $region28
      $region27: #{v_mlp_forward.1} parent=11 // pred_region
        _
      $region28: #{v_mlp_forward.1} parent=11 // pred_fallthru
        _
      // Predicated region
      $region29: #{v_mlp_forward.1} parent=11 // pred_check
        %p262 = pneg %p146
      $region30: #{v_mlp_forward.1} parent=11 // pred_check_branch
        %264 = sbr.rel (%p262) target = $region32
      $region31: #{v_mlp_forward.1} parent=11 // pred_region
        _
      $region32: #{v_mlp_forward.1} parent=11 // pred_fallthru
        _
      // Predicated region
      $region33: #{v_mlp_forward.1} parent=11 // pred_check
        %p265 = pneg %p167
      $region34: #{v_mlp_forward.1} parent=11 // pred_check_branch
        %267 = sbr.rel (%p265) target = $region36
      $region35: #{v_mlp_forward.1} parent=11 // pred_region
        _
      $region36: #{v_mlp_forward.1} parent=11 // pred_fallthru
        _
      // Predicated region
      $region37: #{v_mlp_forward.1} parent=11 // pred_check
        %p268 = pneg %p188
      $region38: #{v_mlp_forward.1} parent=11 // pred_check_branch
        %270 = sbr.rel (%p268) target = $region40
      $region39: #{v_mlp_forward.1} parent=11 // pred_region
        _
      $region40: #{v_mlp_forward.1} parent=11 // pred_fallthru
        _
      // Predicated region
      $region41: #{v_mlp_forward.1} parent=11 // pred_check
        %p271 = pneg %p209
      $region42: #{v_mlp_forward.1} parent=11 // pred_check_branch
        %273 = sbr.rel (%p271) target = $region44
      $region43: #{v_mlp_forward.1} parent=11 // pred_region
        _
      $region44: #{v_mlp_forward.1} parent=11 // pred_fallthru
        _
    $region12: #{v_mlp_forward.1} parent=5 // pred_fallthru
      _
    %p274 = scmp.lt.s32.totalorder %s15, 2
    // Predicated region
    $region45: #{v_mlp_forward.1} parent=5 // pred_check
      %p275 = pneg %p274
    $region46: #{v_mlp_forward.1} parent=5 // pred_check_branch
      %277 = sbr.rel (%p275) target = $region48
    $region47: #{v_mlp_forward.1} parent=5 // pred_region
      // Predicated region
      $region49: #{v_mlp_forward.1} parent=47 // pred_check
        %p278 = pneg %p35
      $region50: #{v_mlp_forward.1} parent=47 // pred_check_branch
        %280 = sbr.rel (%p278) target = $region52
      $region51: #{v_mlp_forward.1} parent=47 // pred_region
        %s281 = smul.u32 19, %s15
        %p282 = scmp.lt.s32.totalorder %s281, 37
        %s283 = scalar_select %p282, %s281, 37
        %s284 = smul.addr %s283, 8
        %s285 = scalar_lea.vmem %s0, %s284
        %s286 = smul.u32 19, %s15
      $region52: #{v_mlp_forward.1} parent=47 // pred_fallthru
        _
    $region48: #{v_mlp_forward.1} parent=5 // pred_fallthru
      _
    %p287 = scmp.le.s32.totalorder 1, %s15
    %p288 = scmp.lt.s32.totalorder %s15, 3
    %p289 = pnand %p287, %p288
    %p290 = pneg %p289
    // Predicated region
    $region53: #{v_mlp_forward.1} parent=5 // pred_check
      _
    $region54: #{v_mlp_forward.1} parent=5 // pred_check_branch
      %292 = sbr.rel (%p289) target = $region56
    $region55: #{v_mlp_forward.1} parent=5 // pred_region
      %s293 = ssub.s32 %s15, 1
      %s294 = smul.u32 19, %s20
      %p295 = scmp.lt.s32.totalorder %s294, 37
      %s296 = scalar_select %p295, %s294, 37
      %s297 = smul.addr %s296, 8
      %s298 = scalar_lea.vmem %s0, %s297
      %p299 = pneg %p41
      %p300 = pneg %p38
      %p301 = pneg %p62
      %p302 = pneg %p59
      %p303 = pneg %p83
      %p304 = pneg %p80
      %p305 = pneg %p104
      %p306 = pneg %p101
      %p307 = pneg %p125
      %p308 = pneg %p122
      %p309 = pneg %p146
      %p310 = pneg %p143
      %p311 = pneg %p167
      %p312 = pneg %p164
      %p313 = pneg %p188
      %p314 = pneg %p185
      %p315 = pneg %p209
      %p316 = pneg %p206
      %p317 = pneg %p235
      %p318 = pneg %p232
      %s319 = smul.u32 19, %s20
      %p320 = scmp.lt.s32.totalorder %s319, 37
      %s321 = scalar_select %p320, %s319, 37
      %s322 = smul.addr %s321, 8
      %s323 = scalar_lea.vmem %s9, %s322
      %s324 = smul.u32 19, %s20
      %p325 = scmp.lt.s32.totalorder %s324, 37
      %s326 = scalar_select %p325, %s324, 37
      %s327 = smul.addr %s326, 8
      %s328 = scalar_lea.vmem %s0, %s327
      %s329 = smul.u32 19, %s20
      %s330 = smul.u32 19, %s20
      %p331 = scmp.lt.s32.totalorder %s330, 37
      %s332 = scalar_select %p331, %s330, 37
      %s333 = smul.addr %s332, 8
      %s334 = scalar_lea.vmem %s9, %s333
      %s335 = smul.u32 19, %s20
      %v336 = vld [vmem:[%s328] sm:$0xff]
      %v337 = vld [vmem:[%s328 + $0x8] sm:$0xff]
      %v338 = vld [vmem:[%s328 + $0x10] sm:$0xff]
      %v339 = vld [vmem:[%s328 + $0x18] sm:$0xff]
      %v340 = vld [vmem:[%s328 + $0x20] sm:$0xff]
      %v341 = vld [vmem:[%s328 + $0x28] sm:$0xff]
      %v342 = vld [vmem:[%s328 + $0x30] sm:$0xff]
      %v343 = vld [vmem:[%s328 + $0x38] sm:$0xff]
      %v344 = vld [vmem:[%s328 + $0x40] sm:$0xff]
      %v345 = vld [vmem:[%s328 + $0x48] sm:$0xff]
      %v346 = vld [vmem:[%s328 + $0x50] sm:$0xff]
      %v347 = vld [vmem:[%s328 + $0x58] sm:$0xff]
      %v348 = vld [vmem:[%s328 + $0x60] sm:$0xff]
      %v349 = vld [vmem:[%s328 + $0x68] sm:$0xff]
      %v350 = vld [vmem:[%s328 + $0x70] sm:$0xff]
      %v351 = vld [vmem:[%s328 + $0x78] sm:$0xff]
      %v352 = vld [vmem:[%s328 + $0x80] sm:$0xff]
      %v353 = vld [vmem:[%s328 + $0x88] sm:$0xff]
      %v354 = vld [vmem:[%s328 + $0x90] sm:$0xff]
      %v355 = vld [vmem:[%s1] sm:$0x1]
      %357 = vset.pattern.permute.xlu0 0
      %358 = vperm.xlu0 %357, %v336
      %v359 = vpop.permute.xlu0 %358
      %362 = vset.pattern.permute.xlu0 0
      %363 = vperm.xlu0 %362, %v337
      %v364 = vpop.permute.xlu0 %363
      %367 = vset.pattern.permute.xlu0 0
      %368 = vperm.xlu0 %367, %v338
      %v369 = vpop.permute.xlu0 %368
      %372 = vset.pattern.permute.xlu0 0
      %373 = vperm.xlu0 %372, %v339
      %v374 = vpop.permute.xlu0 %373
      %377 = vset.pattern.permute.xlu0 0
      %378 = vperm.xlu0 %377, %v340
      %v379 = vpop.permute.xlu0 %378
      %382 = vset.pattern.permute.xlu0 0
      %383 = vperm.xlu0 %382, %v341
      %v384 = vpop.permute.xlu0 %383
      %387 = vset.pattern.permute.xlu0 0
      %388 = vperm.xlu0 %387, %v342
      %v389 = vpop.permute.xlu0 %388
      %392 = vset.pattern.permute.xlu0 0
      %393 = vperm.xlu0 %392, %v343
      %v394 = vpop.permute.xlu0 %393
      %397 = vset.pattern.permute.xlu0 0
      %398 = vperm.xlu0 %397, %v344
      %v399 = vpop.permute.xlu0 %398
      %402 = vset.pattern.permute.xlu0 0
      %403 = vperm.xlu0 %402, %v345
      %v404 = vpop.permute.xlu0 %403
      %407 = vset.pattern.permute.xlu0 0
      %408 = vperm.xlu0 %407, %v346
      %v409 = vpop.permute.xlu0 %408
      %412 = vset.pattern.permute.xlu0 0
      %413 = vperm.xlu0 %412, %v347
      %v414 = vpop.permute.xlu0 %413
      %417 = vset.pattern.permute.xlu0 0
      %418 = vperm.xlu0 %417, %v348
      %v419 = vpop.permute.xlu0 %418
      %422 = vset.pattern.permute.xlu0 0
      %423 = vperm.xlu0 %422, %v349
      %v424 = vpop.permute.xlu0 %423
      %427 = vset.pattern.permute.xlu0 0
      %428 = vperm.xlu0 %427, %v350
      %v429 = vpop.permute.xlu0 %428
      %432 = vset.pattern.permute.xlu0 0
      %433 = vperm.xlu0 %432, %v351
      %v434 = vpop.permute.xlu0 %433
      %437 = vset.pattern.permute.xlu0 0
      %438 = vperm.xlu0 %437, %v352
      %v439 = vpop.permute.xlu0 %438
      %442 = vset.pattern.permute.xlu0 0
      %443 = vperm.xlu0 %442, %v353
      %v444 = vpop.permute.xlu0 %443
      %447 = vset.pattern.permute.xlu0 0
      %448 = vperm.xlu0 %447, %v354
      %v449 = vpop.permute.xlu0 %448
      %v451 = vlaneseq
      %v452 = vshrl.u32 %v451, 7
      %v453 = vsub.s32 0, %v452
      %v454 = vrot.slane %v355, %v453
      %v455 = vmul.f32 %v359, %v454
      %v456 = vmul.f32 %v364, %v454
      %v457 = vmul.f32 %v369, %v454
      %v458 = vmul.f32 %v374, %v454
      %v459 = vmul.f32 %v379, %v454
      %v460 = vmul.f32 %v384, %v454
      %v461 = vmul.f32 %v389, %v454
      %v462 = vmul.f32 %v394, %v454
      %v463 = vmul.f32 %v399, %v454
      %v464 = vmul.f32 %v404, %v454
      %v465 = vmul.f32 %v409, %v454
      %v466 = vmul.f32 %v414, %v454
      %v467 = vmul.f32 %v419, %v454
      %v468 = vmul.f32 %v424, %v454
      %v469 = vmul.f32 %v429, %v454
      %v470 = vmul.f32 %v434, %v454
      %v471 = vmul.f32 %v439, %v454
      %v472 = vmul.f32 %v444, %v454
      %v473 = vmul.f32 %v449, %v454
      %v474 = vld [vmem:[%s1 + $0x1] sm:$0x1]
      %475 = vset.pattern.permute.xlu0 1
      %476 = vperm.xlu0 %475, %v336
      %v477 = vpop.permute.xlu0 %476
      %479 = vset.pattern.permute.xlu0 1
      %480 = vperm.xlu0 %479, %v337
      %v481 = vpop.permute.xlu0 %480
      %483 = vset.pattern.permute.xlu0 1
      %484 = vperm.xlu0 %483, %v338
      %v485 = vpop.permute.xlu0 %484
      %487 = vset.pattern.permute.xlu0 1
      %488 = vperm.xlu0 %487, %v339
      %v489 = vpop.permute.xlu0 %488
      %491 = vset.pattern.permute.xlu0 1
      %492 = vperm.xlu0 %491, %v340
      %v493 = vpop.permute.xlu0 %492
      %495 = vset.pattern.permute.xlu0 1
      %496 = vperm.xlu0 %495, %v341
      %v497 = vpop.permute.xlu0 %496
      %499 = vset.pattern.permute.xlu0 1
      %500 = vperm.xlu0 %499, %v342
      %v501 = vpop.permute.xlu0 %500
      %503 = vset.pattern.permute.xlu0 1
      %504 = vperm.xlu0 %503, %v343
      %v505 = vpop.permute.xlu0 %504
      %507 = vset.pattern.permute.xlu0 1
      %508 = vperm.xlu0 %507, %v344
      %v509 = vpop.permute.xlu0 %508
      %511 = vset.pattern.permute.xlu0 1
      %512 = vperm.xlu0 %511, %v345
      %v513 = vpop.permute.xlu0 %512
      %515 = vset.pattern.permute.xlu0 1
      %516 = vperm.xlu0 %515, %v346
      %v517 = vpop.permute.xlu0 %516
      %519 = vset.pattern.permute.xlu0 1
      %520 = vperm.xlu0 %519, %v347
      %v521 = vpop.permute.xlu0 %520
      %523 = vset.pattern.permute.xlu0 1
      %524 = vperm.xlu0 %523, %v348
      %v525 = vpop.permute.xlu0 %524
      %527 = vset.pattern.permute.xlu0 1
      %528 = vperm.xlu0 %527, %v349
      %v529 = vpop.permute.xlu0 %528
      %531 = vset.pattern.permute.xlu0 1
      %532 = vperm.xlu0 %531, %v350
      %v533 = vpop.permute.xlu0 %532
      %535 = vset.pattern.permute.xlu0 1
      %536 = vperm.xlu0 %535, %v351
      %v537 = vpop.permute.xlu0 %536
      %539 = vset.pattern.permute.xlu0 1
      %540 = vperm.xlu0 %539, %v352
      %v541 = vpop.permute.xlu0 %540
      %543 = vset.pattern.permute.xlu0 1
      %544 = vperm.xlu0 %543, %v353
      %v545 = vpop.permute.xlu0 %544
      %547 = vset.pattern.permute.xlu0 1
      %548 = vperm.xlu0 %547, %v354
      %v549 = vpop.permute.xlu0 %548
      %v551 = vlaneseq
      %v552 = vshrl.u32 %v551, 7
      %v553 = vsub.s32 0, %v552
      %v554 = vrot.slane %v474, %v553
      %v555 = vmul.f32 %v477, %v554
      %v556 = vmul.f32 %v481, %v554
      %v557 = vmul.f32 %v485, %v554
      %v558 = vmul.f32 %v489, %v554
      %v559 = vmul.f32 %v493, %v554
      %v560 = vmul.f32 %v497, %v554
      %v561 = vmul.f32 %v501, %v554
      %v562 = vmul.f32 %v505, %v554
      %v563 = vmul.f32 %v509, %v554
      %v564 = vmul.f32 %v513, %v554
      %v565 = vmul.f32 %v517, %v554
      %v566 = vmul.f32 %v521, %v554
      %v567 = vmul.f32 %v525, %v554
      %v568 = vmul.f32 %v529, %v554
      %v569 = vmul.f32 %v533, %v554
      %v570 = vmul.f32 %v537, %v554
      %v571 = vmul.f32 %v541, %v554
      %v572 = vmul.f32 %v545, %v554
      %v573 = vmul.f32 %v549, %v554
      %v574 = vadd.f32 %v455, %v555
      %v575 = vadd.f32 %v456, %v556
      %v576 = vadd.f32 %v457, %v557
      %v577 = vadd.f32 %v458, %v558
      %v578 = vadd.f32 %v459, %v559
      %v579 = vadd.f32 %v460, %v560
      %v580 = vadd.f32 %v461, %v561
      %v581 = vadd.f32 %v462, %v562
      %v582 = vadd.f32 %v463, %v563
      %v583 = vadd.f32 %v464, %v564
      %v584 = vadd.f32 %v465, %v565
      %v585 = vadd.f32 %v466, %v566
      %v586 = vadd.f32 %v467, %v567
      %v587 = vadd.f32 %v468, %v568
      %v588 = vadd.f32 %v469, %v569
      %v589 = vadd.f32 %v470, %v570
      %v590 = vadd.f32 %v471, %v571
      %v591 = vadd.f32 %v472, %v572
      %v592 = vadd.f32 %v473, %v573
      %v593 = vld [vmem:[%s2] sm:$0x1]
      %v595 = vlaneseq
      %v596 = vshrl.u32 %v595, 7
      %v597 = vsub.s32 0, %v596
      %v598 = vrot.slane %v593, %v597
      %v600 = vadd.f32 %v574, %v598
      %v601 = vadd.f32 %v575, %v598
      %v602 = vadd.f32 %v576, %v598
      %v603 = vadd.f32 %v577, %v598
      %v604 = vadd.f32 %v578, %v598
      %v605 = vadd.f32 %v579, %v598
      %v606 = vadd.f32 %v580, %v598
      %v607 = vadd.f32 %v581, %v598
      %v608 = vadd.f32 %v582, %v598
      %v609 = vadd.f32 %v583, %v598
      %v610 = vadd.f32 %v584, %v598
      %v611 = vadd.f32 %v585, %v598
      %v612 = vadd.f32 %v586, %v598
      %v613 = vadd.f32 %v587, %v598
      %v614 = vadd.f32 %v588, %v598
      %v615 = vadd.f32 %v589, %v598
      %v616 = vadd.f32 %v590, %v598
      %v617 = vadd.f32 %v591, %v598
      %v618 = vadd.f32 %v592, %v598
      %v619 = vmul.f32 %v600, 0.5
      %v620 = vmul.f32 %v601, 0.5
      %v621 = vmul.f32 %v602, 0.5
      %v622 = vmul.f32 %v603, 0.5
      %v623 = vmul.f32 %v604, 0.5
      %v624 = vmul.f32 %v605, 0.5
      %v625 = vmul.f32 %v606, 0.5
      %v626 = vmul.f32 %v607, 0.5
      %v627 = vmul.f32 %v608, 0.5
      %v628 = vmul.f32 %v609, 0.5
      %v629 = vmul.f32 %v610, 0.5
      %v630 = vmul.f32 %v611, 0.5
      %v631 = vmul.f32 %v612, 0.5
      %v632 = vmul.f32 %v613, 0.5
      %v633 = vmul.f32 %v614, 0.5
      %v634 = vmul.f32 %v615, 0.5
      %v635 = vmul.f32 %v616, 0.5
      %v636 = vmul.f32 %v617, 0.5
      %v637 = vmul.f32 %v618, 0.5
      %v638 = vtanh.pop %v619
      %v639 = vtanh.pop %v620
      %v640 = vtanh.pop %v621
      %v641 = vtanh.pop %v622
      %v642 = vtanh.pop %v623
      %v643 = vtanh.pop %v624
      %v644 = vtanh.pop %v625
      %v645 = vtanh.pop %v626
      %v646 = vtanh.pop %v627
      %v647 = vtanh.pop %v628
      %v648 = vtanh.pop %v629
      %v649 = vtanh.pop %v630
      %v650 = vtanh.pop %v631
      %v651 = vtanh.pop %v632
      %v652 = vtanh.pop %v633
      %v653 = vtanh.pop %v634
      %v654 = vtanh.pop %v635
      %v655 = vtanh.pop %v636
      %v656 = vtanh.pop %v637
      %v657 = vmul.f32 %v638, 0.5
      %v658 = vmul.f32 %v639, 0.5
      %v659 = vmul.f32 %v640, 0.5
      %v660 = vmul.f32 %v641, 0.5
      %v661 = vmul.f32 %v642, 0.5
      %v662 = vmul.f32 %v643, 0.5
      %v663 = vmul.f32 %v644, 0.5
      %v664 = vmul.f32 %v645, 0.5
      %v665 = vmul.f32 %v646, 0.5
      %v666 = vmul.f32 %v647, 0.5
      %v667 = vmul.f32 %v648, 0.5
      %v668 = vmul.f32 %v649, 0.5
      %v669 = vmul.f32 %v650, 0.5
      %v670 = vmul.f32 %v651, 0.5
      %v671 = vmul.f32 %v652, 0.5
      %v672 = vmul.f32 %v653, 0.5
      %v673 = vmul.f32 %v654, 0.5
      %v674 = vmul.f32 %v655, 0.5
      %v675 = vmul.f32 %v656, 0.5
      %v676 = vadd.f32 %v657, 0.5
      %v677 = vadd.f32 %v658, 0.5
      %v678 = vadd.f32 %v659, 0.5
      %v679 = vadd.f32 %v660, 0.5
      %v680 = vadd.f32 %v661, 0.5
      %v681 = vadd.f32 %v662, 0.5
      %v682 = vadd.f32 %v663, 0.5
      %v683 = vadd.f32 %v664, 0.5
      %v684 = vadd.f32 %v665, 0.5
      %v685 = vadd.f32 %v666, 0.5
      %v686 = vadd.f32 %v667, 0.5
      %v687 = vadd.f32 %v668, 0.5
      %v688 = vadd.f32 %v669, 0.5
      %v689 = vadd.f32 %v670, 0.5
      %v690 = vadd.f32 %v671, 0.5
      %v691 = vadd.f32 %v672, 0.5
      %v692 = vadd.f32 %v673, 0.5
      %v693 = vadd.f32 %v674, 0.5
      %v694 = vadd.f32 %v675, 0.5
      %v695 = vld [vmem:[%s3] sm:$0xff]
      %v696 = vld [vmem:[%s3 + $0x8] sm:$0xff]
      %v697 = vld [vmem:[%s3 + $0x10] sm:$0xff]
      %v698 = vld [vmem:[%s3 + $0x18] sm:$0xff]
      %v699 = vld [vmem:[%s3 + $0x20] sm:$0xff]
      %v700 = vld [vmem:[%s3 + $0x28] sm:$0xff]
      %v701 = vld [vmem:[%s3 + $0x30] sm:$0xff]
      %v702 = vld [vmem:[%s3 + $0x38] sm:$0xff]
      %v703 = vld [vmem:[%s3 + $0x40] sm:$0xff]
      %v704 = vld [vmem:[%s3 + $0x48] sm:$0xff]
      %v705 = vld [vmem:[%s3 + $0x50] sm:$0xff]
      %v706 = vld [vmem:[%s3 + $0x58] sm:$0xff]
      %v707 = vld [vmem:[%s3 + $0x60] sm:$0xff]
      %v708 = vld [vmem:[%s3 + $0x68] sm:$0xff]
      %v709 = vld [vmem:[%s3 + $0x70] sm:$0xff]
      %v710 = vld [vmem:[%s3 + $0x78] sm:$0xff]
      %v711 = vld [vmem:[%s3 + $0x80] sm:$0xff]
      %v712 = vld [vmem:[%s3 + $0x88] sm:$0xff]
      %v713 = vld [vmem:[%s3 + $0x90] sm:$0xff]
      %v714 = vld [vmem:[%s3 + $0x98] sm:$0xff]
      %v715 = vld [vmem:[%s3 + $0xa0] sm:$0xff]
      %v716 = vld [vmem:[%s3 + $0xa8] sm:$0xff]
      %v717 = vld [vmem:[%s3 + $0xb0] sm:$0xff]
      %v718 = vld [vmem:[%s3 + $0xb8] sm:$0xff]
      %v719 = vld [vmem:[%s3 + $0xc0] sm:$0xff]
      %v720 = vld [vmem:[%s3 + $0xc8] sm:$0xff]
      %v721 = vld [vmem:[%s3 + $0xd0] sm:$0xff]
      %v722 = vld [vmem:[%s3 + $0xd8] sm:$0xff]
      %v723 = vld [vmem:[%s3 + $0xe0] sm:$0xff]
      %v724 = vld [vmem:[%s3 + $0xe8] sm:$0xff]
      %v725 = vld [vmem:[%s3 + $0xf0] sm:$0xff]
      %v726 = vld [vmem:[%s3 + $0xf8] sm:$0xff]
      %v727 = vld [vmem:[%s4] sm:$0x3]
      %v729 = vlaneseq
      %v730 = vshrl.u32 %v729, 7
      %v731 = vsub.s32 0, %v730
      %v732 = vrot.slane %v727, %v731
      %v733 = vlaneseq
      %v734 = vshrl.u32 %v733, 7
      %v735 = vsub.s32 1, %v734
      %v736 = vrot.slane %v727, %v735
      %739 = vmatprep.subr.mxu0 %v726
      %740 = vmatpush1.msra.mxu0 %v725
      %741 = vmatprep.subr.mxu0 %v724
      %742 = vmatpush1.msra.mxu0 %v723
      %743 = vmatprep.subr.mxu0 %v722
      %744 = vmatpush1.msra.mxu0 %v721
      %745 = vmatprep.subr.mxu0 %v720
      %746 = vmatpush1.msra.mxu0 %v719
      %747 = vmatprep.subr.mxu0 %v718
      %748 = vmatpush1.msra.mxu0 %v717
      %749 = vmatprep.subr.mxu0 %v716
      %750 = vmatpush1.msra.mxu0 %v715
      %751 = vmatprep.subr.mxu0 %v714
      %752 = vmatpush1.msra.mxu0 %v713
      %753 = vmatprep.subr.mxu0 %v712
      %754 = vmatpush1.msra.mxu0 %v711
      %755 = vmatprep.subr.mxu0 %v710
      %756 = vmatpush1.msra.mxu0 %v709
      %757 = vmatprep.subr.mxu0 %v708
      %758 = vmatpush1.msra.mxu0 %v707
      %759 = vmatprep.subr.mxu0 %v706
      %760 = vmatpush1.msra.mxu0 %v705
      %761 = vmatprep.subr.mxu0 %v704
      %762 = vmatpush1.msra.mxu0 %v703
      %763 = vmatprep.subr.mxu0 %v702
      %764 = vmatpush1.msra.mxu0 %v701
      %765 = vmatprep.subr.mxu0 %v700
      %766 = vmatpush1.msra.mxu0 %v699
      %767 = vmatprep.subr.mxu0 %v698
      %768 = vmatpush1.msra.mxu0 %v697
      %769 = vmatprep.subr.mxu0 %v696
      %770 = vmatpush1.msra.mxu0 %v695
      %771 = vmatprep.subr.mxu0 0.0
      %772 = vmatpush2.msra.mxu0 0.0
      %773 = vmatprep.subr.mxu0 0.0
      %774 = vmatpush2.msra.mxu0 0.0
      %775 = vmatprep.subr.mxu0 0.0
      %776 = vmatpush2.msra.mxu0 0.0
      %777 = vmatprep.subr.mxu0 0.0
      %778 = vmatpush2.msra.mxu0 0.0
      %779 = vmatprep.subr.mxu0 0.0
      %780 = vmatpush2.msra.mxu0 0.0
      %781 = vmatprep.subr.mxu0 0.0
      %782 = vmatpush2.msra.mxu0 0.0
      %783 = vmatprep.subr.mxu0 0.0
      %784 = vmatpush2.msra.mxu0 0.0
      %785 = vmatprep.subr.mxu0 0.0
      %786 = vmatpush2.msra.mxu0 0.0
      %787 = vmatprep.subr.mxu0 0.0
      %788 = vmatpush2.msra.mxu0 0.0
      %789 = vmatprep.subr.mxu0 0.0
      %790 = vmatpush2.msra.mxu0 0.0
      %791 = vmatprep.subr.mxu0 0.0
      %792 = vmatpush2.msra.mxu0 0.0
      %793 = vmatprep.subr.mxu0 0.0
      %794 = vmatpush2.msra.mxu0 0.0
      %795 = vmatprep.subr.mxu0 0.0
      %796 = vmatpush2.msra.mxu0 0.0
      %797 = vmatprep.subr.mxu0 0.0
      %798 = vmatpush2.msra.mxu0 0.0
      %799 = vmatprep.subr.mxu0 0.0
      %800 = vmatpush2.msra.mxu0 0.0
      %801 = vmatprep.subr.mxu0 0.0
      %802 = vmatpush2.msra.mxu0 0.0
      %803 = vmatprep.mubr.f32.mxu0 0.0
      %804 = vmatmul.mubr.f32.gmra.mxu0 %v676
      %v805 = vpop.f32.mrf.mxu0
      %v806 = vadd.f32 %v732, %v805
      %v807 = vpop.f32.mrf.mxu0
      %v808 = vadd.f32 %v736, %v807
      %809 = vmatprep.mubr.f32.mxu0 0.0
      %810 = vmatmul.mubr.f32.gmra.mxu0 %v677
      %v811 = vpop.f32.mrf.mxu0
      %v812 = vadd.f32 %v732, %v811
      %v813 = vpop.f32.mrf.mxu0
      %v814 = vadd.f32 %v736, %v813
      %815 = vmatprep.mubr.f32.mxu0 0.0
      %816 = vmatmul.mubr.f32.gmra.mxu0 %v678
      %v817 = vpop.f32.mrf.mxu0
      %v818 = vadd.f32 %v732, %v817
      %v819 = vpop.f32.mrf.mxu0
      %v820 = vadd.f32 %v736, %v819
      %821 = vmatprep.mubr.f32.mxu0 0.0
      %822 = vmatmul.mubr.f32.gmra.mxu0 %v679
      %v823 = vpop.f32.mrf.mxu0
      %v824 = vadd.f32 %v732, %v823
      %v825 = vpop.f32.mrf.mxu0
      %v826 = vadd.f32 %v736, %v825
      %827 = vmatprep.mubr.f32.mxu0 0.0
      %828 = vmatmul.mubr.f32.gmra.mxu0 %v680
      %v829 = vpop.f32.mrf.mxu0
      %v830 = vadd.f32 %v732, %v829
      %v831 = vpop.f32.mrf.mxu0
      %v832 = vadd.f32 %v736, %v831
      %833 = vmatprep.mubr.f32.mxu0 0.0
      %834 = vmatmul.mubr.f32.gmra.mxu0 %v681
      %v835 = vpop.f32.mrf.mxu0
      %v836 = vadd.f32 %v732, %v835
      %v837 = vpop.f32.mrf.mxu0
      %v838 = vadd.f32 %v736, %v837
      %839 = vmatprep.mubr.f32.mxu0 0.0
      %840 = vmatmul.mubr.f32.gmra.mxu0 %v682
      %v841 = vpop.f32.mrf.mxu0
      %v842 = vadd.f32 %v732, %v841
      %v843 = vpop.f32.mrf.mxu0
      %v844 = vadd.f32 %v736, %v843
      %845 = vmatprep.mubr.f32.mxu0 0.0
      %846 = vmatmul.mubr.f32.gmra.mxu0 %v683
      %v847 = vpop.f32.mrf.mxu0
      %v848 = vadd.f32 %v732, %v847
      %v849 = vpop.f32.mrf.mxu0
      %v850 = vadd.f32 %v736, %v849
      %851 = vmatprep.mubr.f32.mxu0 0.0
      %852 = vmatmul.mubr.f32.gmra.mxu0 %v684
      %v853 = vpop.f32.mrf.mxu0
      %v854 = vadd.f32 %v732, %v853
      %v855 = vpop.f32.mrf.mxu0
      %v856 = vadd.f32 %v736, %v855
      %857 = vmatprep.mubr.f32.mxu0 0.0
      %858 = vmatmul.mubr.f32.gmra.mxu0 %v685
      %v859 = vpop.f32.mrf.mxu0
      %v860 = vadd.f32 %v732, %v859
      %v861 = vpop.f32.mrf.mxu0
      %v862 = vadd.f32 %v736, %v861
      %863 = vmatprep.mubr.f32.mxu0 0.0
      %864 = vmatmul.mubr.f32.gmra.mxu0 %v686
      %v865 = vpop.f32.mrf.mxu0
      %v866 = vadd.f32 %v732, %v865
      %v867 = vpop.f32.mrf.mxu0
      %v868 = vadd.f32 %v736, %v867
      %869 = vmatprep.mubr.f32.mxu0 0.0
      %870 = vmatmul.mubr.f32.gmra.mxu0 %v687
      %v871 = vpop.f32.mrf.mxu0
      %v872 = vadd.f32 %v732, %v871
      %v873 = vpop.f32.mrf.mxu0
      %v874 = vadd.f32 %v736, %v873
      %875 = vmatprep.mubr.f32.mxu0 0.0
      %876 = vmatmul.mubr.f32.gmra.mxu0 %v688
      %v877 = vpop.f32.mrf.mxu0
      %v878 = vadd.f32 %v732, %v877
      %v879 = vpop.f32.mrf.mxu0
      %v880 = vadd.f32 %v736, %v879
      %881 = vmatprep.mubr.f32.mxu0 0.0
      %882 = vmatmul.mubr.f32.gmra.mxu0 %v689
      %v883 = vpop.f32.mrf.mxu0
      %v884 = vadd.f32 %v732, %v883
      %v885 = vpop.f32.mrf.mxu0
      %v886 = vadd.f32 %v736, %v885
      %887 = vmatprep.mubr.f32.mxu0 0.0
      %888 = vmatmul.mubr.f32.gmra.mxu0 %v690
      %v889 = vpop.f32.mrf.mxu0
      %v890 = vadd.f32 %v732, %v889
      %v891 = vpop.f32.mrf.mxu0
      %v892 = vadd.f32 %v736, %v891
      %893 = vmatprep.mubr.f32.mxu0 0.0
      %894 = vmatmul.mubr.f32.gmra.mxu0 %v691
      %v895 = vpop.f32.mrf.mxu0
      %v896 = vadd.f32 %v732, %v895
      %v897 = vpop.f32.mrf.mxu0
      %v898 = vadd.f32 %v736, %v897
      %899 = vmatprep.mubr.f32.mxu0 0.0
      %900 = vmatmul.mubr.f32.gmra.mxu0 %v692
      %v901 = vpop.f32.mrf.mxu0
      %v902 = vadd.f32 %v732, %v901
      %v903 = vpop.f32.mrf.mxu0
      %v904 = vadd.f32 %v736, %v903
      %905 = vmatprep.mubr.f32.mxu0 0.0
      %906 = vmatmul.mubr.f32.gmra.mxu0 %v693
      %v907 = vpop.f32.mrf.mxu0
      %v908 = vadd.f32 %v732, %v907
      %v909 = vpop.f32.mrf.mxu0
      %v910 = vadd.f32 %v736, %v909
      %911 = vmatprep.mubr.f32.mxu0 0.0
      %912 = vmatmul.mubr.f32.gmra.mxu0 %v694
      %v913 = vpop.f32.mrf.mxu0
      %v914 = vadd.f32 %v732, %v913
      %v915 = vpop.f32.mrf.mxu0
      %v916 = vadd.f32 %v736, %v915
      %917 = vdwg.mxu0
      %v918 = vmul.f32 %v806, 0.5
      %v919 = vmul.f32 %v808, 0.5
      %v920 = vmul.f32 %v812, 0.5
      %v921 = vmul.f32 %v814, 0.5
      %v922 = vmul.f32 %v818, 0.5
      %v923 = vmul.f32 %v820, 0.5
      %v924 = vmul.f32 %v824, 0.5
      %v925 = vmul.f32 %v826, 0.5
      %v926 = vmul.f32 %v830, 0.5
      %v927 = vmul.f32 %v832, 0.5
      %v928 = vmul.f32 %v836, 0.5
      %v929 = vmul.f32 %v838, 0.5
      %v930 = vmul.f32 %v842, 0.5
      %v931 = vmul.f32 %v844, 0.5
      %v932 = vmul.f32 %v848, 0.5
      %v933 = vmul.f32 %v850, 0.5
      %v934 = vmul.f32 %v854, 0.5
      %v935 = vmul.f32 %v856, 0.5
      %v936 = vmul.f32 %v860, 0.5
      %v937 = vmul.f32 %v862, 0.5
      %v938 = vmul.f32 %v866, 0.5
      %v939 = vmul.f32 %v868, 0.5
      %v940 = vmul.f32 %v872, 0.5
      %v941 = vmul.f32 %v874, 0.5
      %v942 = vmul.f32 %v878, 0.5
      %v943 = vmul.f32 %v880, 0.5
      %v944 = vmul.f32 %v884, 0.5
      %v945 = vmul.f32 %v886, 0.5
      %v946 = vmul.f32 %v890, 0.5
      %v947 = vmul.f32 %v892, 0.5
      %v948 = vmul.f32 %v896, 0.5
      %v949 = vmul.f32 %v898, 0.5
      %v950 = vmul.f32 %v902, 0.5
      %v951 = vmul.f32 %v904, 0.5
      %v952 = vmul.f32 %v908, 0.5
      %v953 = vmul.f32 %v910, 0.5
      %v954 = vmul.f32 %v914, 0.5
      %v955 = vmul.f32 %v916, 0.5
      %v956 = vtanh.pop %v918
      %v957 = vtanh.pop %v919
      %v958 = vtanh.pop %v920
      %v959 = vtanh.pop %v921
      %v960 = vtanh.pop %v922
      %v961 = vtanh.pop %v923
      %v962 = vtanh.pop %v924
      %v963 = vtanh.pop %v925
      %v964 = vtanh.pop %v926
      %v965 = vtanh.pop %v927
      %v966 = vtanh.pop %v928
      %v967 = vtanh.pop %v929
      %v968 = vtanh.pop %v930
      %v969 = vtanh.pop %v931
      %v970 = vtanh.pop %v932
      %v971 = vtanh.pop %v933
      %v972 = vtanh.pop %v934
      %v973 = vtanh.pop %v935
      %v974 = vtanh.pop %v936
      %v975 = vtanh.pop %v937
      %v976 = vtanh.pop %v938
      %v977 = vtanh.pop %v939
      %v978 = vtanh.pop %v940
      %v979 = vtanh.pop %v941
      %v980 = vtanh.pop %v942
      %v981 = vtanh.pop %v943
      %v982 = vtanh.pop %v944
      %v983 = vtanh.pop %v945
      %v984 = vtanh.pop %v946
      %v985 = vtanh.pop %v947
      %v986 = vtanh.pop %v948
      %v987 = vtanh.pop %v949
      %v988 = vtanh.pop %v950
      %v989 = vtanh.pop %v951
      %v990 = vtanh.pop %v952
      %v991 = vtanh.pop %v953
      %v992 = vtanh.pop %v954
      %v993 = vtanh.pop %v955
      %v994 = vmul.f32 %v956, 0.5
      %v995 = vmul.f32 %v957, 0.5
      %v996 = vmul.f32 %v958, 0.5
      %v997 = vmul.f32 %v959, 0.5
      %v998 = vmul.f32 %v960, 0.5
      %v999 = vmul.f32 %v961, 0.5
      %v1000 = vmul.f32 %v962, 0.5
      %v1001 = vmul.f32 %v963, 0.5
      %v1002 = vmul.f32 %v964, 0.5
      %v1003 = vmul.f32 %v965, 0.5
      %v1004 = vmul.f32 %v966, 0.5
      %v1005 = vmul.f32 %v967, 0.5
      %v1006 = vmul.f32 %v968, 0.5
      %v1007 = vmul.f32 %v969, 0.5
      %v1008 = vmul.f32 %v970, 0.5
      %v1009 = vmul.f32 %v971, 0.5
      %v1010 = vmul.f32 %v972, 0.5
      %v1011 = vmul.f32 %v973, 0.5
      %v1012 = vmul.f32 %v974, 0.5
      %v1013 = vmul.f32 %v975, 0.5
      %v1014 = vmul.f32 %v976, 0.5
      %v1015 = vmul.f32 %v977, 0.5
      %v1016 = vmul.f32 %v978, 0.5
      %v1017 = vmul.f32 %v979, 0.5
      %v1018 = vmul.f32 %v980, 0.5
      %v1019 = vmul.f32 %v981, 0.5
      %v1020 = vmul.f32 %v982, 0.5
      %v1021 = vmul.f32 %v983, 0.5
      %v1022 = vmul.f32 %v984, 0.5
      %v1023 = vmul.f32 %v985, 0.5
      %v1024 = vmul.f32 %v986, 0.5
      %v1025 = vmul.f32 %v987, 0.5
      %v1026 = vmul.f32 %v988, 0.5
      %v1027 = vmul.f32 %v989, 0.5
      %v1028 = vmul.f32 %v990, 0.5
      %v1029 = vmul.f32 %v991, 0.5
      %v1030 = vmul.f32 %v992, 0.5
      %v1031 = vmul.f32 %v993, 0.5
      %v1032 = vadd.f32 %v994, 0.5
      %v1033 = vadd.f32 %v995, 0.5
      %v1034 = vadd.f32 %v996, 0.5
      %v1035 = vadd.f32 %v997, 0.5
      %v1036 = vadd.f32 %v998, 0.5
      %v1037 = vadd.f32 %v999, 0.5
      %v1038 = vadd.f32 %v1000, 0.5
      %v1039 = vadd.f32 %v1001, 0.5
      %v1040 = vadd.f32 %v1002, 0.5
      %v1041 = vadd.f32 %v1003, 0.5
      %v1042 = vadd.f32 %v1004, 0.5
      %v1043 = vadd.f32 %v1005, 0.5
      %v1044 = vadd.f32 %v1006, 0.5
      %v1045 = vadd.f32 %v1007, 0.5
      %v1046 = vadd.f32 %v1008, 0.5
      %v1047 = vadd.f32 %v1009, 0.5
      %v1048 = vadd.f32 %v1010, 0.5
      %v1049 = vadd.f32 %v1011, 0.5
      %v1050 = vadd.f32 %v1012, 0.5
      %v1051 = vadd.f32 %v1013, 0.5
      %v1052 = vadd.f32 %v1014, 0.5
      %v1053 = vadd.f32 %v1015, 0.5
      %v1054 = vadd.f32 %v1016, 0.5
      %v1055 = vadd.f32 %v1017, 0.5
      %v1056 = vadd.f32 %v1018, 0.5
      %v1057 = vadd.f32 %v1019, 0.5
      %v1058 = vadd.f32 %v1020, 0.5
      %v1059 = vadd.f32 %v1021, 0.5
      %v1060 = vadd.f32 %v1022, 0.5
      %v1061 = vadd.f32 %v1023, 0.5
      %v1062 = vadd.f32 %v1024, 0.5
      %v1063 = vadd.f32 %v1025, 0.5
      %v1064 = vadd.f32 %v1026, 0.5
      %v1065 = vadd.f32 %v1027, 0.5
      %v1066 = vadd.f32 %v1028, 0.5
      %v1067 = vadd.f32 %v1029, 0.5
      %v1068 = vadd.f32 %v1030, 0.5
      %v1069 = vadd.f32 %v1031, 0.5
      %v1070 = vld [vmem:[%s5] sm:$0xff]
      %v1071 = vld [vmem:[%s5 + $0x8] sm:$0xff]
      %v1072 = vld [vmem:[%s5 + $0x10] sm:$0xff]
      %v1073 = vld [vmem:[%s5 + $0x18] sm:$0xff]
      %v1074 = vld [vmem:[%s5 + $0x20] sm:$0xff]
      %v1075 = vld [vmem:[%s5 + $0x28] sm:$0xff]
      %v1076 = vld [vmem:[%s5 + $0x30] sm:$0xff]
      %v1077 = vld [vmem:[%s5 + $0x38] sm:$0xff]
      %v1078 = vld [vmem:[%s5 + $0x40] sm:$0xff]
      %v1079 = vld [vmem:[%s5 + $0x48] sm:$0xff]
      %v1080 = vld [vmem:[%s5 + $0x50] sm:$0xff]
      %v1081 = vld [vmem:[%s5 + $0x58] sm:$0xff]
      %v1082 = vld [vmem:[%s5 + $0x60] sm:$0xff]
      %v1083 = vld [vmem:[%s5 + $0x68] sm:$0xff]
      %v1084 = vld [vmem:[%s5 + $0x70] sm:$0xff]
      %v1085 = vld [vmem:[%s5 + $0x78] sm:$0xff]
      %v1086 = vld [vmem:[%s5 + $0x80] sm:$0xff]
      %v1087 = vld [vmem:[%s5 + $0x88] sm:$0xff]
      %v1088 = vld [vmem:[%s5 + $0x90] sm:$0xff]
      %v1089 = vld [vmem:[%s5 + $0x98] sm:$0xff]
      %v1090 = vld [vmem:[%s5 + $0xa0] sm:$0xff]
      %v1091 = vld [vmem:[%s5 + $0xa8] sm:$0xff]
      %v1092 = vld [vmem:[%s5 + $0xb0] sm:$0xff]
      %v1093 = vld [vmem:[%s5 + $0xb8] sm:$0xff]
      %v1094 = vld [vmem:[%s5 + $0xc0] sm:$0xff]
      %v1095 = vld [vmem:[%s5 + $0xc8] sm:$0xff]
      %v1096 = vld [vmem:[%s5 + $0xd0] sm:$0xff]
      %v1097 = vld [vmem:[%s5 + $0xd8] sm:$0xff]
      %v1098 = vld [vmem:[%s5 + $0xe0] sm:$0xff]
      %v1099 = vld [vmem:[%s5 + $0xe8] sm:$0xff]
      %v1100 = vld [vmem:[%s5 + $0xf0] sm:$0xff]
      %v1101 = vld [vmem:[%s5 + $0xf8] sm:$0xff]
      %v1102 = vld [vmem:[%s5 + $0x100] sm:$0xff]
      %v1103 = vld [vmem:[%s5 + $0x108] sm:$0xff]
      %v1104 = vld [vmem:[%s5 + $0x110] sm:$0xff]
      %v1105 = vld [vmem:[%s5 + $0x118] sm:$0xff]
      %v1106 = vld [vmem:[%s5 + $0x120] sm:$0xff]
      %v1107 = vld [vmem:[%s5 + $0x128] sm:$0xff]
      %v1108 = vld [vmem:[%s5 + $0x130] sm:$0xff]
      %v1109 = vld [vmem:[%s5 + $0x138] sm:$0xff]
      %v1110 = vld [vmem:[%s5 + $0x140] sm:$0xff]
      %v1111 = vld [vmem:[%s5 + $0x148] sm:$0xff]
      %v1112 = vld [vmem:[%s5 + $0x150] sm:$0xff]
      %v1113 = vld [vmem:[%s5 + $0x158] sm:$0xff]
      %v1114 = vld [vmem:[%s5 + $0x160] sm:$0xff]
      %v1115 = vld [vmem:[%s5 + $0x168] sm:$0xff]
      %v1116 = vld [vmem:[%s5 + $0x170] sm:$0xff]
      %v1117 = vld [vmem:[%s5 + $0x178] sm:$0xff]
      %v1118 = vld [vmem:[%s5 + $0x180] sm:$0xff]
      %v1119 = vld [vmem:[%s5 + $0x188] sm:$0xff]
      %v1120 = vld [vmem:[%s5 + $0x190] sm:$0xff]
      %v1121 = vld [vmem:[%s5 + $0x198] sm:$0xff]
      %v1122 = vld [vmem:[%s5 + $0x1a0] sm:$0xff]
      %v1123 = vld [vmem:[%s5 + $0x1a8] sm:$0xff]
      %v1124 = vld [vmem:[%s5 + $0x1b0] sm:$0xff]
      %v1125 = vld [vmem:[%s5 + $0x1b8] sm:$0xff]
      %v1126 = vld [vmem:[%s5 + $0x1c0] sm:$0xff]
      %v1127 = vld [vmem:[%s5 + $0x1c8] sm:$0xff]
      %v1128 = vld [vmem:[%s5 + $0x1d0] sm:$0xff]
      %v1129 = vld [vmem:[%s5 + $0x1d8] sm:$0xff]
      %v1130 = vld [vmem:[%s5 + $0x1e0] sm:$0xff]
      %v1131 = vld [vmem:[%s5 + $0x1e8] sm:$0xff]
      %v1132 = vld [vmem:[%s5 + $0x1f0] sm:$0xff]
      %v1133 = vld [vmem:[%s5 + $0x1f8] sm:$0xff]
      %v1134 = vld [vmem:[%s6] sm:$0x3]
      %v1136 = vlaneseq
      %v1137 = vshrl.u32 %v1136, 7
      %v1138 = vsub.s32 0, %v1137
      %v1139 = vrot.slane %v1134, %v1138
      %v1140 = vlaneseq
      %v1141 = vshrl.u32 %v1140, 7
      %v1142 = vsub.s32 1, %v1141
      %v1143 = vrot.slane %v1134, %v1142
      %1146 = vmatprep.subr.mxu0 %v1101
      %1147 = vmatpush1.msra.mxu0 %v1100
      %1148 = vmatprep.subr.mxu0 %v1099
      %1149 = vmatpush1.msra.mxu0 %v1098
      %1150 = vmatprep.subr.mxu0 %v1097
      %1151 = vmatpush1.msra.mxu0 %v1096
      %1152 = vmatprep.subr.mxu0 %v1095
      %1153 = vmatpush1.msra.mxu0 %v1094
      %1154 = vmatprep.subr.mxu0 %v1093
      %1155 = vmatpush1.msra.mxu0 %v1092
      %1156 = vmatprep.subr.mxu0 %v1091
      %1157 = vmatpush1.msra.mxu0 %v1090
      %1158 = vmatprep.subr.mxu0 %v1089
      %1159 = vmatpush1.msra.mxu0 %v1088
      %1160 = vmatprep.subr.mxu0 %v1087
      %1161 = vmatpush1.msra.mxu0 %v1086
      %1162 = vmatprep.subr.mxu0 %v1085
      %1163 = vmatpush1.msra.mxu0 %v1084
      %1164 = vmatprep.subr.mxu0 %v1083
      %1165 = vmatpush1.msra.mxu0 %v1082
      %1166 = vmatprep.subr.mxu0 %v1081
      %1167 = vmatpush1.msra.mxu0 %v1080
      %1168 = vmatprep.subr.mxu0 %v1079
      %1169 = vmatpush1.msra.mxu0 %v1078
      %1170 = vmatprep.subr.mxu0 %v1077
      %1171 = vmatpush1.msra.mxu0 %v1076
      %1172 = vmatprep.subr.mxu0 %v1075
      %1173 = vmatpush1.msra.mxu0 %v1074
      %1174 = vmatprep.subr.mxu0 %v1073
      %1175 = vmatpush1.msra.mxu0 %v1072
      %1176 = vmatprep.subr.mxu0 %v1071
      %1177 = vmatpush1.msra.mxu0 %v1070
      %1178 = vmatprep.subr.mxu0 %v1133
      %1179 = vmatpush2.msra.mxu0 %v1132
      %1180 = vmatprep.subr.mxu0 %v1131
      %1181 = vmatpush2.msra.mxu0 %v1130
      %1182 = vmatprep.subr.mxu0 %v1129
      %1183 = vmatpush2.msra.mxu0 %v1128
      %1184 = vmatprep.subr.mxu0 %v1127
      %1185 = vmatpush2.msra.mxu0 %v1126
      %1186 = vmatprep.subr.mxu0 %v1125
      %1187 = vmatpush2.msra.mxu0 %v1124
      %1188 = vmatprep.subr.mxu0 %v1123
      %1189 = vmatpush2.msra.mxu0 %v1122
      %1190 = vmatprep.subr.mxu0 %v1121
      %1191 = vmatpush2.msra.mxu0 %v1120
      %1192 = vmatprep.subr.mxu0 %v1119
      %1193 = vmatpush2.msra.mxu0 %v1118
      %1194 = vmatprep.subr.mxu0 %v1117
      %1195 = vmatpush2.msra.mxu0 %v1116
      %1196 = vmatprep.subr.mxu0 %v1115
      %1197 = vmatpush2.msra.mxu0 %v1114
      %1198 = vmatprep.subr.mxu0 %v1113
      %1199 = vmatpush2.msra.mxu0 %v1112
      %1200 = vmatprep.subr.mxu0 %v1111
      %1201 = vmatpush2.msra.mxu0 %v1110
      %1202 = vmatprep.subr.mxu0 %v1109
      %1203 = vmatpush2.msra.mxu0 %v1108
      %1204 = vmatprep.subr.mxu0 %v1107
      %1205 = vmatpush2.msra.mxu0 %v1106
      %1206 = vmatprep.subr.mxu0 %v1105
      %1207 = vmatpush2.msra.mxu0 %v1104
      %1208 = vmatprep.subr.mxu0 %v1103
      %1209 = vmatpush2.msra.mxu0 %v1102
      %1210 = vmatprep.mubr.f32.mxu0 %v1033
      %1211 = vmatmul.mubr.f32.gmra.mxu0 %v1032
      %v1212 = vpop.f32.mrf.mxu0
      %v1213 = vadd.f32 %v1139, %v1212
      %v1214 = vpop.f32.mrf.mxu0
      %v1215 = vadd.f32 %v1143, %v1214
      %1216 = vmatprep.mubr.f32.mxu0 %v1035
      %1217 = vmatmul.mubr.f32.gmra.mxu0 %v1034
      %v1218 = vpop.f32.mrf.mxu0
      %v1219 = vadd.f32 %v1139, %v1218
      %v1220 = vpop.f32.mrf.mxu0
      %v1221 = vadd.f32 %v1143, %v1220
      %1222 = vmatprep.mubr.f32.mxu0 %v1037
      %1223 = vmatmul.mubr.f32.gmra.mxu0 %v1036
      %v1224 = vpop.f32.mrf.mxu0
      %v1225 = vadd.f32 %v1139, %v1224
      %v1226 = vpop.f32.mrf.mxu0
      %v1227 = vadd.f32 %v1143, %v1226
      %1228 = vmatprep.mubr.f32.mxu0 %v1039
      %1229 = vmatmul.mubr.f32.gmra.mxu0 %v1038
      %v1230 = vpop.f32.mrf.mxu0
      %v1231 = vadd.f32 %v1139, %v1230
      %v1232 = vpop.f32.mrf.mxu0
      %v1233 = vadd.f32 %v1143, %v1232
      %1234 = vmatprep.mubr.f32.mxu0 %v1041
      %1235 = vmatmul.mubr.f32.gmra.mxu0 %v1040
      %v1236 = vpop.f32.mrf.mxu0
      %v1237 = vadd.f32 %v1139, %v1236
      %v1238 = vpop.f32.mrf.mxu0
      %v1239 = vadd.f32 %v1143, %v1238
      %1240 = vmatprep.mubr.f32.mxu0 %v1043
      %1241 = vmatmul.mubr.f32.gmra.mxu0 %v1042
      %v1242 = vpop.f32.mrf.mxu0
      %v1243 = vadd.f32 %v1139, %v1242
      %v1244 = vpop.f32.mrf.mxu0
      %v1245 = vadd.f32 %v1143, %v1244
      %1246 = vmatprep.mubr.f32.mxu0 %v1045
      %1247 = vmatmul.mubr.f32.gmra.mxu0 %v1044
      %v1248 = vpop.f32.mrf.mxu0
      %v1249 = vadd.f32 %v1139, %v1248
      %v1250 = vpop.f32.mrf.mxu0
      %v1251 = vadd.f32 %v1143, %v1250
      %1252 = vmatprep.mubr.f32.mxu0 %v1047
      %1253 = vmatmul.mubr.f32.gmra.mxu0 %v1046
      %v1254 = vpop.f32.mrf.mxu0
      %v1255 = vadd.f32 %v1139, %v1254
      %v1256 = vpop.f32.mrf.mxu0
      %v1257 = vadd.f32 %v1143, %v1256
      %1258 = vmatprep.mubr.f32.mxu0 %v1049
      %1259 = vmatmul.mubr.f32.gmra.mxu0 %v1048
      %v1260 = vpop.f32.mrf.mxu0
      %v1261 = vadd.f32 %v1139, %v1260
      %v1262 = vpop.f32.mrf.mxu0
      %v1263 = vadd.f32 %v1143, %v1262
      %1264 = vmatprep.mubr.f32.mxu0 %v1051
      %1265 = vmatmul.mubr.f32.gmra.mxu0 %v1050
      %v1266 = vpop.f32.mrf.mxu0
      %v1267 = vadd.f32 %v1139, %v1266
      %v1268 = vpop.f32.mrf.mxu0
      %v1269 = vadd.f32 %v1143, %v1268
      %1270 = vmatprep.mubr.f32.mxu0 %v1053
      %1271 = vmatmul.mubr.f32.gmra.mxu0 %v1052
      %v1272 = vpop.f32.mrf.mxu0
      %v1273 = vadd.f32 %v1139, %v1272
      %v1274 = vpop.f32.mrf.mxu0
      %v1275 = vadd.f32 %v1143, %v1274
      %1276 = vmatprep.mubr.f32.mxu0 %v1055
      %1277 = vmatmul.mubr.f32.gmra.mxu0 %v1054
      %v1278 = vpop.f32.mrf.mxu0
      %v1279 = vadd.f32 %v1139, %v1278
      %v1280 = vpop.f32.mrf.mxu0
      %v1281 = vadd.f32 %v1143, %v1280
      %1282 = vmatprep.mubr.f32.mxu0 %v1057
      %1283 = vmatmul.mubr.f32.gmra.mxu0 %v1056
      %v1284 = vpop.f32.mrf.mxu0
      %v1285 = vadd.f32 %v1139, %v1284
      %v1286 = vpop.f32.mrf.mxu0
      %v1287 = vadd.f32 %v1143, %v1286
      %1288 = vmatprep.mubr.f32.mxu0 %v1059
      %1289 = vmatmul.mubr.f32.gmra.mxu0 %v1058
      %v1290 = vpop.f32.mrf.mxu0
      %v1291 = vadd.f32 %v1139, %v1290
      %v1292 = vpop.f32.mrf.mxu0
      %v1293 = vadd.f32 %v1143, %v1292
      %1294 = vmatprep.mubr.f32.mxu0 %v1061
      %1295 = vmatmul.mubr.f32.gmra.mxu0 %v1060
      %v1296 = vpop.f32.mrf.mxu0
      %v1297 = vadd.f32 %v1139, %v1296
      %v1298 = vpop.f32.mrf.mxu0
      %v1299 = vadd.f32 %v1143, %v1298
      %1300 = vmatprep.mubr.f32.mxu0 %v1063
      %1301 = vmatmul.mubr.f32.gmra.mxu0 %v1062
      %v1302 = vpop.f32.mrf.mxu0
      %v1303 = vadd.f32 %v1139, %v1302
      %v1304 = vpop.f32.mrf.mxu0
      %v1305 = vadd.f32 %v1143, %v1304
      %1306 = vmatprep.mubr.f32.mxu0 %v1065
      %1307 = vmatmul.mubr.f32.gmra.mxu0 %v1064
      %v1308 = vpop.f32.mrf.mxu0
      %v1309 = vadd.f32 %v1139, %v1308
      %v1310 = vpop.f32.mrf.mxu0
      %v1311 = vadd.f32 %v1143, %v1310
      %1312 = vmatprep.mubr.f32.mxu0 %v1067
      %1313 = vmatmul.mubr.f32.gmra.mxu0 %v1066
      %v1314 = vpop.f32.mrf.mxu0
      %v1315 = vadd.f32 %v1139, %v1314
      %v1316 = vpop.f32.mrf.mxu0
      %v1317 = vadd.f32 %v1143, %v1316
      %1318 = vmatprep.mubr.f32.mxu0 %v1069
      %1319 = vmatmul.mubr.f32.gmra.mxu0 %v1068
      %v1320 = vpop.f32.mrf.mxu0
      %v1321 = vadd.f32 %v1139, %v1320
      %v1322 = vpop.f32.mrf.mxu0
      %v1323 = vadd.f32 %v1143, %v1322
      %1324 = vdwg.mxu0
      %v1325 = vmul.f32 %v1213, 0.5
      %v1326 = vmul.f32 %v1215, 0.5
      %v1327 = vmul.f32 %v1219, 0.5
      %v1328 = vmul.f32 %v1221, 0.5
      %v1329 = vmul.f32 %v1225, 0.5
      %v1330 = vmul.f32 %v1227, 0.5
      %v1331 = vmul.f32 %v1231, 0.5
      %v1332 = vmul.f32 %v1233, 0.5
      %v1333 = vmul.f32 %v1237, 0.5
      %v1334 = vmul.f32 %v1239, 0.5
      %v1335 = vmul.f32 %v1243, 0.5
      %v1336 = vmul.f32 %v1245, 0.5
      %v1337 = vmul.f32 %v1249, 0.5
      %v1338 = vmul.f32 %v1251, 0.5
      %v1339 = vmul.f32 %v1255, 0.5
      %v1340 = vmul.f32 %v1257, 0.5
      %v1341 = vmul.f32 %v1261, 0.5
      %v1342 = vmul.f32 %v1263, 0.5
      %v1343 = vmul.f32 %v1267, 0.5
      %v1344 = vmul.f32 %v1269, 0.5
      %v1345 = vmul.f32 %v1273, 0.5
      %v1346 = vmul.f32 %v1275, 0.5
      %v1347 = vmul.f32 %v1279, 0.5
      %v1348 = vmul.f32 %v1281, 0.5
      %v1349 = vmul.f32 %v1285, 0.5
      %v1350 = vmul.f32 %v1287, 0.5
      %v1351 = vmul.f32 %v1291, 0.5
      %v1352 = vmul.f32 %v1293, 0.5
      %v1353 = vmul.f32 %v1297, 0.5
      %v1354 = vmul.f32 %v1299, 0.5
      %v1355 = vmul.f32 %v1303, 0.5
      %v1356 = vmul.f32 %v1305, 0.5
      %v1357 = vmul.f32 %v1309, 0.5
      %v1358 = vmul.f32 %v1311, 0.5
      %v1359 = vmul.f32 %v1315, 0.5
      %v1360 = vmul.f32 %v1317, 0.5
      %v1361 = vmul.f32 %v1321, 0.5
      %v1362 = vmul.f32 %v1323, 0.5
      %v1363 = vtanh.pop %v1325
      %v1364 = vtanh.pop %v1326
      %v1365 = vtanh.pop %v1327
      %v1366 = vtanh.pop %v1328
      %v1367 = vtanh.pop %v1329
      %v1368 = vtanh.pop %v1330
      %v1369 = vtanh.pop %v1331
      %v1370 = vtanh.pop %v1332
      %v1371 = vtanh.pop %v1333
      %v1372 = vtanh.pop %v1334
      %v1373 = vtanh.pop %v1335
      %v1374 = vtanh.pop %v1336
      %v1375 = vtanh.pop %v1337
      %v1376 = vtanh.pop %v1338
      %v1377 = vtanh.pop %v1339
      %v1378 = vtanh.pop %v1340
      %v1379 = vtanh.pop %v1341
      %v1380 = vtanh.pop %v1342
      %v1381 = vtanh.pop %v1343
      %v1382 = vtanh.pop %v1344
      %v1383 = vtanh.pop %v1345
      %v1384 = vtanh.pop %v1346
      %v1385 = vtanh.pop %v1347
      %v1386 = vtanh.pop %v1348
      %v1387 = vtanh.pop %v1349
      %v1388 = vtanh.pop %v1350
      %v1389 = vtanh.pop %v1351
      %v1390 = vtanh.pop %v1352
      %v1391 = vtanh.pop %v1353
      %v1392 = vtanh.pop %v1354
      %v1393 = vtanh.pop %v1355
      %v1394 = vtanh.pop %v1356
      %v1395 = vtanh.pop %v1357
      %v1396 = vtanh.pop %v1358
      %v1397 = vtanh.pop %v1359
      %v1398 = vtanh.pop %v1360
      %v1399 = vtanh.pop %v1361
      %v1400 = vtanh.pop %v1362
      %v1401 = vmul.f32 %v1363, 0.5
      %v1402 = vmul.f32 %v1364, 0.5
      %v1403 = vmul.f32 %v1365, 0.5
      %v1404 = vmul.f32 %v1366, 0.5
      %v1405 = vmul.f32 %v1367, 0.5
      %v1406 = vmul.f32 %v1368, 0.5
      %v1407 = vmul.f32 %v1369, 0.5
      %v1408 = vmul.f32 %v1370, 0.5
      %v1409 = vmul.f32 %v1371, 0.5
      %v1410 = vmul.f32 %v1372, 0.5
      %v1411 = vmul.f32 %v1373, 0.5
      %v1412 = vmul.f32 %v1374, 0.5
      %v1413 = vmul.f32 %v1375, 0.5
      %v1414 = vmul.f32 %v1376, 0.5
      %v1415 = vmul.f32 %v1377, 0.5
      %v1416 = vmul.f32 %v1378, 0.5
      %v1417 = vmul.f32 %v1379, 0.5
      %v1418 = vmul.f32 %v1380, 0.5
      %v1419 = vmul.f32 %v1381, 0.5
      %v1420 = vmul.f32 %v1382, 0.5
      %v1421 = vmul.f32 %v1383, 0.5
      %v1422 = vmul.f32 %v1384, 0.5
      %v1423 = vmul.f32 %v1385, 0.5
      %v1424 = vmul.f32 %v1386, 0.5
      %v1425 = vmul.f32 %v1387, 0.5
      %v1426 = vmul.f32 %v1388, 0.5
      %v1427 = vmul.f32 %v1389, 0.5
      %v1428 = vmul.f32 %v1390, 0.5
      %v1429 = vmul.f32 %v1391, 0.5
      %v1430 = vmul.f32 %v1392, 0.5
      %v1431 = vmul.f32 %v1393, 0.5
      %v1432 = vmul.f32 %v1394, 0.5
      %v1433 = vmul.f32 %v1395, 0.5
      %v1434 = vmul.f32 %v1396, 0.5
      %v1435 = vmul.f32 %v1397, 0.5
      %v1436 = vmul.f32 %v1398, 0.5
      %v1437 = vmul.f32 %v1399, 0.5
      %v1438 = vmul.f32 %v1400, 0.5
      %v1439 = vadd.f32 %v1401, 0.5
      %v1440 = vadd.f32 %v1402, 0.5
      %v1441 = vadd.f32 %v1403, 0.5
      %v1442 = vadd.f32 %v1404, 0.5
      %v1443 = vadd.f32 %v1405, 0.5
      %v1444 = vadd.f32 %v1406, 0.5
      %v1445 = vadd.f32 %v1407, 0.5
      %v1446 = vadd.f32 %v1408, 0.5
      %v1447 = vadd.f32 %v1409, 0.5
      %v1448 = vadd.f32 %v1410, 0.5
      %v1449 = vadd.f32 %v1411, 0.5
      %v1450 = vadd.f32 %v1412, 0.5
      %v1451 = vadd.f32 %v1413, 0.5
      %v1452 = vadd.f32 %v1414, 0.5
      %v1453 = vadd.f32 %v1415, 0.5
      %v1454 = vadd.f32 %v1416, 0.5
      %v1455 = vadd.f32 %v1417, 0.5
      %v1456 = vadd.f32 %v1418, 0.5
      %v1457 = vadd.f32 %v1419, 0.5
      %v1458 = vadd.f32 %v1420, 0.5
      %v1459 = vadd.f32 %v1421, 0.5
      %v1460 = vadd.f32 %v1422, 0.5
      %v1461 = vadd.f32 %v1423, 0.5
      %v1462 = vadd.f32 %v1424, 0.5
      %v1463 = vadd.f32 %v1425, 0.5
      %v1464 = vadd.f32 %v1426, 0.5
      %v1465 = vadd.f32 %v1427, 0.5
      %v1466 = vadd.f32 %v1428, 0.5
      %v1467 = vadd.f32 %v1429, 0.5
      %v1468 = vadd.f32 %v1430, 0.5
      %v1469 = vadd.f32 %v1431, 0.5
      %v1470 = vadd.f32 %v1432, 0.5
      %v1471 = vadd.f32 %v1433, 0.5
      %v1472 = vadd.f32 %v1434, 0.5
      %v1473 = vadd.f32 %v1435, 0.5
      %v1474 = vadd.f32 %v1436, 0.5
      %v1475 = vadd.f32 %v1437, 0.5
      %v1476 = vadd.f32 %v1438, 0.5
      %v1477 = vld [vmem:[%s7] sm:$0xff]
      %v1478 = vld [vmem:[%s7 + $0x8] sm:$0xff]
      %v1479 = vld [vmem:[%s7 + $0x10] sm:$0xff]
      %v1480 = vld [vmem:[%s7 + $0x18] sm:$0xff]
      %v1481 = vld [vmem:[%s7 + $0x20] sm:$0xff]
      %v1482 = vld [vmem:[%s7 + $0x28] sm:$0xff]
      %v1483 = vld [vmem:[%s7 + $0x30] sm:$0xff]
      %v1484 = vld [vmem:[%s7 + $0x38] sm:$0xff]
      %v1485 = vld [vmem:[%s7 + $0x40] sm:$0xff]
      %v1486 = vld [vmem:[%s7 + $0x48] sm:$0xff]
      %v1487 = vld [vmem:[%s7 + $0x50] sm:$0xff]
      %v1488 = vld [vmem:[%s7 + $0x58] sm:$0xff]
      %v1489 = vld [vmem:[%s7 + $0x60] sm:$0xff]
      %v1490 = vld [vmem:[%s7 + $0x68] sm:$0xff]
      %v1491 = vld [vmem:[%s7 + $0x70] sm:$0xff]
      %v1492 = vld [vmem:[%s7 + $0x78] sm:$0xff]
      %v1493 = vld [vmem:[%s7 + $0x80] sm:$0xff]
      %v1494 = vld [vmem:[%s7 + $0x88] sm:$0xff]
      %v1495 = vld [vmem:[%s7 + $0x90] sm:$0xff]
      %v1496 = vld [vmem:[%s7 + $0x98] sm:$0xff]
      %v1497 = vld [vmem:[%s7 + $0xa0] sm:$0xff]
      %v1498 = vld [vmem:[%s7 + $0xa8] sm:$0xff]
      %v1499 = vld [vmem:[%s7 + $0xb0] sm:$0xff]
      %v1500 = vld [vmem:[%s7 + $0xb8] sm:$0xff]
      %v1501 = vld [vmem:[%s7 + $0xc0] sm:$0xff]
      %v1502 = vld [vmem:[%s7 + $0xc8] sm:$0xff]
      %v1503 = vld [vmem:[%s7 + $0xd0] sm:$0xff]
      %v1504 = vld [vmem:[%s7 + $0xd8] sm:$0xff]
      %v1505 = vld [vmem:[%s7 + $0xe0] sm:$0xff]
      %v1506 = vld [vmem:[%s7 + $0xe8] sm:$0xff]
      %v1507 = vld [vmem:[%s7 + $0xf0] sm:$0xff]
      %v1508 = vld [vmem:[%s7 + $0xf8] sm:$0xff]
      %v1509 = vld [vmem:[%s8] sm:$0x1]
      %v1511 = vlaneseq
      %v1512 = vshrl.u32 %v1511, 7
      %v1513 = vsub.s32 0, %v1512
      %v1514 = vrot.slane %v1509, %v1513
      %1516 = vmatprep.subr.mxu0 0.0
      %1517 = vmatpush1.msra.mxu0 %v1492
      %1518 = vmatprep.subr.mxu0 0.0
      %1519 = vmatpush1.msra.mxu0 %v1491
      %1520 = vmatprep.subr.mxu0 0.0
      %1521 = vmatpush1.msra.mxu0 %v1490
      %1522 = vmatprep.subr.mxu0 0.0
      %1523 = vmatpush1.msra.mxu0 %v1489
      %1524 = vmatprep.subr.mxu0 0.0
      %1525 = vmatpush1.msra.mxu0 %v1488
      %1526 = vmatprep.subr.mxu0 0.0
      %1527 = vmatpush1.msra.mxu0 %v1487
      %1528 = vmatprep.subr.mxu0 0.0
      %1529 = vmatpush1.msra.mxu0 %v1486
      %1530 = vmatprep.subr.mxu0 0.0
      %1531 = vmatpush1.msra.mxu0 %v1485
      %1532 = vmatprep.subr.mxu0 0.0
      %1533 = vmatpush1.msra.mxu0 %v1484
      %1534 = vmatprep.subr.mxu0 0.0
      %1535 = vmatpush1.msra.mxu0 %v1483
      %1536 = vmatprep.subr.mxu0 0.0
      %1537 = vmatpush1.msra.mxu0 %v1482
      %1538 = vmatprep.subr.mxu0 0.0
      %1539 = vmatpush1.msra.mxu0 %v1481
      %1540 = vmatprep.subr.mxu0 0.0
      %1541 = vmatpush1.msra.mxu0 %v1480
      %1542 = vmatprep.subr.mxu0 0.0
      %1543 = vmatpush1.msra.mxu0 %v1479
      %1544 = vmatprep.subr.mxu0 0.0
      %1545 = vmatpush1.msra.mxu0 %v1478
      %1546 = vmatprep.subr.mxu0 0.0
      %1547 = vmatpush1.msra.mxu0 %v1477
      %1548 = vmatprep.subr.mxu0 0.0
      %1549 = vmatpush2.msra.mxu0 %v1508
      %1550 = vmatprep.subr.mxu0 0.0
      %1551 = vmatpush2.msra.mxu0 %v1507
      %1552 = vmatprep.subr.mxu0 0.0
      %1553 = vmatpush2.msra.mxu0 %v1506
      %1554 = vmatprep.subr.mxu0 0.0
      %1555 = vmatpush2.msra.mxu0 %v1505
      %1556 = vmatprep.subr.mxu0 0.0
      %1557 = vmatpush2.msra.mxu0 %v1504
      %1558 = vmatprep.subr.mxu0 0.0
      %1559 = vmatpush2.msra.mxu0 %v1503
      %1560 = vmatprep.subr.mxu0 0.0
      %1561 = vmatpush2.msra.mxu0 %v1502
      %1562 = vmatprep.subr.mxu0 0.0
      %1563 = vmatpush2.msra.mxu0 %v1501
      %1564 = vmatprep.subr.mxu0 0.0
      %1565 = vmatpush2.msra.mxu0 %v1500
      %1566 = vmatprep.subr.mxu0 0.0
      %1567 = vmatpush2.msra.mxu0 %v1499
      %1568 = vmatprep.subr.mxu0 0.0
      %1569 = vmatpush2.msra.mxu0 %v1498
      %1570 = vmatprep.subr.mxu0 0.0
      %1571 = vmatpush2.msra.mxu0 %v1497
      %1572 = vmatprep.subr.mxu0 0.0
      %1573 = vmatpush2.msra.mxu0 %v1496
      %1574 = vmatprep.subr.mxu0 0.0
      %1575 = vmatpush2.msra.mxu0 %v1495
      %1576 = vmatprep.subr.mxu0 0.0
      %1577 = vmatpush2.msra.mxu0 %v1494
      %1578 = vmatprep.subr.mxu0 0.0
      %1579 = vmatpush2.msra.mxu0 %v1493
      %1580 = vmatprep.mubr.f32.mxu0 %v1440
      %1581 = vmatmul.mubr.f32.gmra.mxu0 %v1439
      %v1582 = vpop.f32.mrf.mxu0
      %v1583 = vadd.f32 %v1514, %v1582
      %v1584 = vpop.f32.mrf.mxu0
      %1585 = vmatprep.mubr.f32.mxu0 %v1442
      %1586 = vmatmul.mubr.f32.gmra.mxu0 %v1441
      %v1587 = vpop.f32.mrf.mxu0
      %v1588 = vadd.f32 %v1514, %v1587
      %v1589 = vpop.f32.mrf.mxu0
      %1590 = vmatprep.mubr.f32.mxu0 %v1444
      %1591 = vmatmul.mubr.f32.gmra.mxu0 %v1443
      %v1592 = vpop.f32.mrf.mxu0
      %v1593 = vadd.f32 %v1514, %v1592
      %v1594 = vpop.f32.mrf.mxu0
      %1595 = vmatprep.mubr.f32.mxu0 %v1446
      %1596 = vmatmul.mubr.f32.gmra.mxu0 %v1445
      %v1597 = vpop.f32.mrf.mxu0
      %v1598 = vadd.f32 %v1514, %v1597
      %v1599 = vpop.f32.mrf.mxu0
      %1600 = vmatprep.mubr.f32.mxu0 %v1448
      %1601 = vmatmul.mubr.f32.gmra.mxu0 %v1447
      %v1602 = vpop.f32.mrf.mxu0
      %v1603 = vadd.f32 %v1514, %v1602
      %v1604 = vpop.f32.mrf.mxu0
      %1605 = vmatprep.mubr.f32.mxu0 %v1450
      %1606 = vmatmul.mubr.f32.gmra.mxu0 %v1449
      %v1607 = vpop.f32.mrf.mxu0
      %v1608 = vadd.f32 %v1514, %v1607
      %v1609 = vpop.f32.mrf.mxu0
      %1610 = vmatprep.mubr.f32.mxu0 %v1452
      %1611 = vmatmul.mubr.f32.gmra.mxu0 %v1451
      %v1612 = vpop.f32.mrf.mxu0
      %v1613 = vadd.f32 %v1514, %v1612
      %v1614 = vpop.f32.mrf.mxu0
      %1615 = vmatprep.mubr.f32.mxu0 %v1454
      %1616 = vmatmul.mubr.f32.gmra.mxu0 %v1453
      %v1617 = vpop.f32.mrf.mxu0
      %v1618 = vadd.f32 %v1514, %v1617
      %v1619 = vpop.f32.mrf.mxu0
      %1620 = vmatprep.mubr.f32.mxu0 %v1456
      %1621 = vmatmul.mubr.f32.gmra.mxu0 %v1455
      %v1622 = vpop.f32.mrf.mxu0
      %v1623 = vadd.f32 %v1514, %v1622
      %v1624 = vpop.f32.mrf.mxu0
      %1625 = vmatprep.mubr.f32.mxu0 %v1458
      %1626 = vmatmul.mubr.f32.gmra.mxu0 %v1457
      %v1627 = vpop.f32.mrf.mxu0
      %v1628 = vadd.f32 %v1514, %v1627
      %v1629 = vpop.f32.mrf.mxu0
      %1630 = vmatprep.mubr.f32.mxu0 %v1460
      %1631 = vmatmul.mubr.f32.gmra.mxu0 %v1459
      %v1632 = vpop.f32.mrf.mxu0
      %v1633 = vadd.f32 %v1514, %v1632
      %v1634 = vpop.f32.mrf.mxu0
      %1635 = vmatprep.mubr.f32.mxu0 %v1462
      %1636 = vmatmul.mubr.f32.gmra.mxu0 %v1461
      %v1637 = vpop.f32.mrf.mxu0
      %v1638 = vadd.f32 %v1514, %v1637
      %v1639 = vpop.f32.mrf.mxu0
      %1640 = vmatprep.mubr.f32.mxu0 %v1464
      %1641 = vmatmul.mubr.f32.gmra.mxu0 %v1463
      %v1642 = vpop.f32.mrf.mxu0
      %v1643 = vadd.f32 %v1514, %v1642
      %v1644 = vpop.f32.mrf.mxu0
      %1645 = vmatprep.mubr.f32.mxu0 %v1466
      %1646 = vmatmul.mubr.f32.gmra.mxu0 %v1465
      %v1647 = vpop.f32.mrf.mxu0
      %v1648 = vadd.f32 %v1514, %v1647
      %v1649 = vpop.f32.mrf.mxu0
      %1650 = vmatprep.mubr.f32.mxu0 %v1468
      %1651 = vmatmul.mubr.f32.gmra.mxu0 %v1467
      %v1652 = vpop.f32.mrf.mxu0
      %v1653 = vadd.f32 %v1514, %v1652
      %v1654 = vpop.f32.mrf.mxu0
      %1655 = vmatprep.mubr.f32.mxu0 %v1470
      %1656 = vmatmul.mubr.f32.gmra.mxu0 %v1469
      %v1657 = vpop.f32.mrf.mxu0
      %v1658 = vadd.f32 %v1514, %v1657
      %v1659 = vpop.f32.mrf.mxu0
      %1660 = vmatprep.mubr.f32.mxu0 %v1472
      %1661 = vmatmul.mubr.f32.gmra.mxu0 %v1471
      %v1662 = vpop.f32.mrf.mxu0
      %v1663 = vadd.f32 %v1514, %v1662
      %v1664 = vpop.f32.mrf.mxu0
      %1665 = vmatprep.mubr.f32.mxu0 %v1474
      %1666 = vmatmul.mubr.f32.gmra.mxu0 %v1473
      %v1667 = vpop.f32.mrf.mxu0
      %v1668 = vadd.f32 %v1514, %v1667
      %v1669 = vpop.f32.mrf.mxu0
      %1670 = vmatprep.mubr.f32.mxu0 %v1476
      %1671 = vmatmul.mubr.f32.gmra.mxu0 %v1475
      %v1672 = vpop.f32.mrf.mxu0
      %v1673 = vadd.f32 %v1514, %v1672
      %v1674 = vpop.f32.mrf.mxu0
      %1675 = vdwg.mxu0
      %vm1676 = vcmask 15360
      %1677 = vst.msk [vmem:[%s334] sm:$0xff] %vm1676, %v1583
      %1678 = vst.msk [vmem:[%s334 + $0x8] sm:$0xff] %vm1676, %v1588
      %1679 = vst.msk [vmem:[%s334 + $0x10] sm:$0xff] %vm1676, %v1593
      %1680 = vst.msk [vmem:[%s334 + $0x18] sm:$0xff] %vm1676, %v1598
      %1681 = vst.msk [vmem:[%s334 + $0x20] sm:$0xff] %vm1676, %v1603
      %1682 = vst.msk [vmem:[%s334 + $0x28] sm:$0xff] %vm1676, %v1608
      %1683 = vst.msk [vmem:[%s334 + $0x30] sm:$0xff] %vm1676, %v1613
      %1684 = vst.msk [vmem:[%s334 + $0x38] sm:$0xff] %vm1676, %v1618
      %1685 = vst.msk [vmem:[%s334 + $0x40] sm:$0xff] %vm1676, %v1623
      %1686 = vst.msk [vmem:[%s334 + $0x48] sm:$0xff] %vm1676, %v1628
      %1687 = vst.msk [vmem:[%s334 + $0x50] sm:$0xff] %vm1676, %v1633
      %1688 = vst.msk [vmem:[%s334 + $0x58] sm:$0xff] %vm1676, %v1638
      %1689 = vst.msk [vmem:[%s334 + $0x60] sm:$0xff] %vm1676, %v1643
      %1690 = vst.msk [vmem:[%s334 + $0x68] sm:$0xff] %vm1676, %v1648
      %1691 = vst.msk [vmem:[%s334 + $0x70] sm:$0xff] %vm1676, %v1653
      %1692 = vst.msk [vmem:[%s334 + $0x78] sm:$0xff] %vm1676, %v1658
      %1693 = vst.msk [vmem:[%s334 + $0x80] sm:$0xff] %vm1676, %v1663
      %1694 = vst.msk [vmem:[%s334 + $0x88] sm:$0xff] %vm1676, %v1668
      %1695 = vst.msk [vmem:[%s334 + $0x90] sm:$0xff] %vm1676, %v1673
      %s1696 = smul.u32 19, %s20
      %p1697 = scmp.lt.s32.totalorder %s1696, 37
      %s1698 = scalar_select %p1697, %s1696, 37
      %s1699 = smul.addr %s1698, 8
      %s1700 = scalar_lea.vmem %s9, %s1699
      // Predicated region
      $region57: #{v_mlp_forward.1} parent=55 // pred_check
        %p1701 = pneg %p232
      $region58: #{v_mlp_forward.1} parent=55 // pred_check_branch
        %1703 = sbr.rel (%p1701) target = $region60
      $region59: #{v_mlp_forward.1} parent=55 // pred_region
        %s1704 = smul.u32 19, %s20
      $region60: #{v_mlp_forward.1} parent=55 // pred_fallthru
        _
    $region56: #{v_mlp_forward.1} parent=5 // pred_fallthru
      _
    %p1705 = scmp.le.s32.totalorder 2, %s15
    // Predicated region
    $region61: #{v_mlp_forward.1} parent=5 // pred_check
      %p1706 = pneg %p1705
    $region62: #{v_mlp_forward.1} parent=5 // pred_check_branch
      %1708 = sbr.rel (%p1706) target = $region64
    $region63: #{v_mlp_forward.1} parent=5 // pred_region
      %s1709 = ssub.s32 %s15, 2
      // Predicated region
      $region65: #{v_mlp_forward.1} parent=63 // pred_check
        %p1710 = pneg %p238
      $region66: #{v_mlp_forward.1} parent=63 // pred_check_branch
        %1712 = sbr.rel (%p1710) target = $region68
      $region67: #{v_mlp_forward.1} parent=63 // pred_region
        %s1713 = smul.u32 19, %s21
        %p1714 = scmp.lt.s32.totalorder %s1713, 37
        %s1715 = scalar_select %p1714, %s1713, 37
        %s1716 = smul.addr %s1715, 8
        %s1717 = scalar_lea.vmem %s9, %s1716
      $region68: #{v_mlp_forward.1} parent=63 // pred_fallthru
        _
    $region64: #{v_mlp_forward.1} parent=5 // pred_fallthru
      _
  $region6: #{v_mlp_forward.1} parent=0 // loop_footer
    %s19 = sadd.s32 1, %s15
  $region7: #{v_mlp_forward.1} parent=0 // loop_footer_branch
    %14 = sbr.rel target = $region3
  $region8: #{v_mlp_forward.1} parent=0 // loop_exit
    _

</llo_original>
